<compile_context>
chip_gen: v6e
topology: v6e:2x2x1
jax: 0.10.0
libtpu: 0.0.40
codegen_flags: <defaults>
</compile_context>

<pallas_src>
import jax
import jax.numpy as jnp
from jax.experimental import pallas as pl
from jax.experimental.pallas import tpu as pltpu

KH = KW = 3
NUM_CLASSES = 10
NUM_DOMAINS = 2
OUT_LANES = 128   # lane-dense fused output width (>= 128 for unmasked stores)


# ----------------------------------------------------------------------------
# Fused Pallas kernel (one batch tile per grid step)
# ----------------------------------------------------------------------------

def dann_fused_kernel(p_ref, cw_ref, cb_ref, w1_ref, b1_ref, w2_ref, b2_ref,
                      o_ref):
    """conv3x3(same)+ReLU+GAP -> [label head | domain head] for one batch tile.

    p  : (TB*P, 9C)   im2col patches (lane-dense LHS), tap-major/channel-minor
    cw : (9C, F)      conv weight, K ordered (kh*KW + kw)*C + c
    cb : (1, F)
    w1 : (F, 2*Hd)    [lp_w1 | dc_w1] packed side by side
    b1 : (1, 2*Hd)
    w2 : (2*Hd, 128)  block-diagonal: rows 0:Hd -> cols 0:10 (label),
                      rows Hd:2Hd -> cols 10:12 (domain), zeros elsewhere
    b2 : (1, 128)
    o  : (TB, 128)    lane-dense output slab
    """
    tb = o_ref.shape[0]
    p_count = p_ref.shape[0] // tb          # spatial positions per image
    f = cw_ref.shape[1]

    # 3x3 'same' conv == one MXU matmul on the im2col LHS (K = 9C).
    # NOTE: for real widths on v6e/v7x, cast LHS/RHS to bf16 here (keep
    # preferred_element_type=f32); at toy sizes f32 keeps tolerances tight.
    y = jnp.dot(p_ref[...], cw_ref[...], preferred_element_type=jnp.float32)
    y = jnp.maximum(y + cb_ref[...], 0.0)                         # (TB*P, F)

    # Global average pool: spatial sum * compile-time 1/P (tile-aligned reshape:
    # P is a multiple of 8, last dim F preserved).
    feat = y.reshape(tb, p_count, f).sum(axis=1) * jnp.float32(1.0 / p_count)

    # GradReversal is identity in the forward pass -> both heads consume `feat`.
    h = jnp.maximum(
        jnp.dot(feat, w1_ref[...], preferred_element_type=jnp.float32)
        + b1_ref[...], 0.0)                                        # (TB, 2Hd)
    o_ref[...] = (jnp.dot(h, w2_ref[...], preferred_element_type=jnp.float32)
                  + b2_ref[...])                                   # (TB, 128)


# ----------------------------------------------------------------------------
# One-time weight packing (hoisted out of the per-call hot path)
# ----------------------------------------------------------------------------

def pack_params(params):
    """Pack both MLP heads into fused, lane-dense weight blocks. Call ONCE."""
    hdim = params["lp_w1"].shape[1]
    w1 = jnp.concatenate([params["lp_w1"], params["dc_w1"]], axis=1)   # (F, 2Hd)
    b1 = jnp.concatenate([params["lp_b1"], params["dc_b1"]], axis=1)   # (1, 2Hd)
    w2 = jnp.zeros((2 * hdim, OUT_LANES), jnp.float32)
    w2 = w2.at[:hdim, :NUM_CLASSES].set(params["lp_w2"])
    w2 = w2.at[hdim:, NUM_CLASSES:NUM_CLASSES + NUM_DOMAINS].set(params["dc_w2"])
    b2 = jnp.zeros((1, OUT_LANES), jnp.float32)
    b2 = b2.at[:, :NUM_CLASSES].set(params["lp_b2"])
    b2 = b2.at[:, NUM_CLASSES:NUM_CLASSES + NUM_DOMAINS].set(params["dc_b2"])
    return {"conv_w": params["conv_w"], "conv_b": params["conv_b"],
            "w1": w1, "b1": b1, "w2": w2, "b2": b2}


# ----------------------------------------------------------------------------
# Wrapper: im2col + batch-tiled pallas_call
# ----------------------------------------------------------------------------

@jax.jit
def dann_apply(packed, x_nchw):
    """One launch -> (class_logits (B,10), domain_logits (B,2))."""
    B, C, H, W = x_nchw.shape
    P = H * W
    K9 = KH * KW * C

    # im2col in the wrapper: lane-dense (B, P, 9C) patches (~36 KiB / image).
    # Tap order = (kh, kw) major, channel minor -> matches conv_w row layout.
    x_nhwc = jnp.transpose(x_nchw, (0, 2, 3, 1))
    xp = jnp.pad(x_nhwc, ((0, 0), (1, 1), (1, 1), (0, 0)))   # 'same' padding
    taps = [xp[:, i:i + H, j:j + W, :] for i in range(KH) for j in range(KW)]
    patches = jnp.concatenate(taps, axis=-1).reshape(B, P, K9)

    # Batch tile: multiple of 8 -> sublane-dense output stores.  For real batch
    # sizes use TB >= 256 to amortize the ~0.35us/step pipeline overhead; on v7x
    # budget TB against 64 MiB physical / 32 MiB default-scoped VMEM
    # (~2 buffers x TB x (patches + conv activation) per step).
    TB = 8 if B <= 256 else 256
    B_pad = ((B + TB - 1) // TB) * TB
    if B_pad != B:
        patches = jnp.pad(patches, ((0, B_pad - B), (0, 0), (0, 0)))
    patches = patches.reshape(B_pad * P, K9)

    F = packed["conv_w"].shape[1]
    H2 = packed["w1"].shape[1]

    def weight_spec(shape):
        # Full-shape block, constant index -> stays VMEM-resident across grid.
        return pl.BlockSpec(shape, lambda i: (0, 0))

    out = pl.pallas_call(
        dann_fused_kernel,
        out_shape=jax.ShapeDtypeStruct((B_pad, OUT_LANES), jnp.float32),
        grid=(B_pad // TB,),
        in_specs=[
            pl.BlockSpec((TB * P, K9), lambda i: (i, 0)),   # patches, batch-tiled
            weight_spec((K9, F)),
            weight_spec((1, F)),
            weight_spec((F, H2)),
            weight_spec((1, H2)),
            weight_spec((H2, OUT_LANES)),
            weight_spec((1, OUT_LANES)),
        ],
        out_specs=pl.BlockSpec((TB, OUT_LANES), lambda i: (i, 0)),
        compiler_params=pltpu.CompilerParams(
            dimension_semantics=("parallel",)),
    )(patches, packed["conv_w"], packed["conv_b"], packed["w1"],
      packed["b1"], packed["w2"], packed["b2"])

    class_logits = out[:B, :NUM_CLASSES]
    domain_logits = out[:B, NUM_CLASSES:NUM_CLASSES + NUM_DOMAINS]
    return class_logits, domain_logits


def dann_forward(packed, x_nchw):
    """DANN.forward(x) == forward_net.forward(x)."""
    return dann_apply(packed, x_nchw)[0]


def dann_forward_domain(packed, x_nchw):
    """DANN.forward_domain(x) == dc(grl(forward_feature(x)))."""
    return dann_apply(packed, x_nchw)[1]


# Gradient-reversal layer (identity forward, negated grad) — kept for API parity.
@jax.custom_vjp
def grad_reversal(x):
    return x


def _grl_fwd(x):
    return x, None


def _grl_bwd(_, g):
    return (-g,)


grad_reversal.defvjp(_grl_fwd, _grl_bwd)


# ----------------------------------------------------------------------------
# Parameters & pure-JAX reference (for correctness checking)
# ----------------------------------------------------------------------------

def init_params(key, in_ch=4, feat_ch=32, hidden=32, num_classes=NUM_CLASSES):
    ks = jax.random.split(key, 5)
    K = KH * KW * in_ch
    # conv_w ordering: K = (kh*KW + kw) * C + c (tap-major, channel-minor).
    # To port a PyTorch conv weight (F, C, KH, KW): w.permute(2, 3, 1, 0).reshape(K, F)
    return {
        "conv_w": jax.random.normal(ks[0], (K, feat_ch), jnp.float32) * 0.1,
        "conv_b": jnp.zeros((1, feat_ch), jnp.float32),
        "lp_w1": jax.random.normal(ks[1], (feat_ch, hidden), jnp.float32) * 0.1,
        "lp_b1": jnp.zeros((1, hidden), jnp.float32),
        "lp_w2": jax.random.normal(ks[2], (hidden, num_classes), jnp.float32) * 0.1,
        "lp_b2": jnp.zeros((1, num_classes), jnp.float32),
        "dc_w1": jax.random.normal(ks[3], (feat_ch, hidden), jnp.float32) * 0.1,
        "dc_b1": jnp.zeros((1, hidden), jnp.float32),
        "dc_w2": jax.random.normal(ks[4], (hidden, NUM_DOMAINS), jnp.float32) * 0.1,
        "dc_b2": jnp.zeros((1, NUM_DOMAINS), jnp.float32),
    }


def _reference(params, x_nchw):
    """Pure-JAX forward, same tap/channel ordering as the kernel."""
    B, C, H, W = x_nchw.shape
    hi = jax.lax.Precision.HIGHEST
    xp = jnp.pad(x_nchw, ((0, 0), (0, 0), (1, 1), (1, 1)))
    taps = [xp[:, :, i:i + H, j:j + W] for i in range(KH) for j in range(KW)]
    p = jnp.stack(taps, axis=1)                       # (B, 9, C, H, W)
    p = p.transpose(0, 3, 4, 1, 2).reshape(B * H * W, KH * KW * C)
    y = jnp.maximum(jnp.dot(p, params["conv_w"], precision=hi)
                    + params["conv_b"], 0.0)
    feat = y.reshape(B, H * W, -1).mean(axis=1)

    def head(f, w1, b1, w2, b2):
        h = jnp.maximum(jnp.dot(f, w1, precision=hi) + b1, 0.0)
        return jnp.dot(h, w2, precision=hi) + b2

    cls = head(feat, params["lp_w1"], params["lp_b1"],
               params["lp_w2"], params["lp_b2"])
    dom = head(grad_reversal(feat), params["dc_w1"], params["dc_b1"],
               params["dc_w2"], params["dc_b2"])
    return cls, dom


# ----------------------------------------------------------------------------
# Main
# ----------------------------------------------------------------------------

if __name__ == "__main__":
    key = jax.random.PRNGKey(0)
    k_x, k_p = jax.random.split(key)

    B, C, H, W = 2, 4, 16, 16
    x = jax.random.normal(k_x, (B, C, H, W), jnp.float32)
    params = init_params(k_p, in_ch=C, feat_ch=32, hidden=32)

    # Weight packing done ONCE, outside the per-call hot path.
    packed = pack_params(params)

    class_logits, domain_logits = dann_apply(packed, x)
    jax.block_until_ready((class_logits, domain_logits))

    assert class_logits.shape == (B, NUM_CLASSES)
    assert domain_logits.shape == (B, NUM_DOMAINS)

    ref_cls, ref_dom = _reference(params, x)
    assert jnp.allclose(class_logits, ref_cls, atol=1e-4, rtol=1e-4)
    assert jnp.allclose(domain_logits, ref_dom, atol=1e-4, rtol=1e-4)

    print("KERNEL_OK")
</pallas_src>

<mosaic_0001>
module attributes {stable_mosaic.version = 11 : i64} {
  func.func @dann_fused_kernel(%arg0: i32, %arg1: memref<2048x36xf32, #tpu.memory_space<vmem>>, %arg2: memref<36x32xf32, #tpu.memory_space<vmem>>, %arg3: memref<1x32xf32, #tpu.memory_space<vmem>>, %arg4: memref<32x64xf32, #tpu.memory_space<vmem>>, %arg5: memref<1x64xf32, #tpu.memory_space<vmem>>, %arg6: memref<64x128xf32, #tpu.memory_space<vmem>>, %arg7: memref<1x128xf32, #tpu.memory_space<vmem>>, %arg8: memref<8x128xf32, #tpu.memory_space<vmem>>) attributes {dimension_semantics = [#tpu.dimension_semantics<parallel>], iteration_bounds = array<i64: 1>, scalar_prefetch = 0 : i64, scratch_operands = 0 : i64, tpu.core_type = #tpu.core_type<tc>, window_params = [{transform_indices = @transform_0, window_bounds = array<i64: 2048, 36>}, {pipeline_mode = #tpu.pipeline_mode<synchronous>, transform_indices = @transform_1, window_bounds = array<i64: 36, 32>}, {pipeline_mode = #tpu.pipeline_mode<synchronous>, transform_indices = @transform_2, window_bounds = array<i64: 1, 32>}, {pipeline_mode = #tpu.pipeline_mode<synchronous>, transform_indices = @transform_3, window_bounds = array<i64: 32, 64>}, {pipeline_mode = #tpu.pipeline_mode<synchronous>, transform_indices = @transform_4, window_bounds = array<i64: 1, 64>}, {pipeline_mode = #tpu.pipeline_mode<synchronous>, transform_indices = @transform_5, window_bounds = array<i64: 64, 128>}, {pipeline_mode = #tpu.pipeline_mode<synchronous>, transform_indices = @transform_6, window_bounds = array<i64: 1, 128>}, {transform_indices = @transform_7, window_bounds = array<i64: 8, 128>}]} {
    %c0 = arith.constant 0 : index
    %c0_0 = arith.constant 0 : index
    %0 = vector.load %arg1[%c0, %c0_0] : memref<2048x36xf32, #tpu.memory_space<vmem>>, vector<2048x36xf32>
    %c0_1 = arith.constant 0 : index
    %c0_2 = arith.constant 0 : index
    %1 = vector.load %arg2[%c0_1, %c0_2] : memref<36x32xf32, #tpu.memory_space<vmem>>, vector<36x32xf32>
    %cst = arith.constant dense<0.000000e+00> : vector<2048x32xf32>
    %2 = tpu.matmul %0, %1, %cst {dimension_numbers = #tpu.dot_dimension_numbers<[1], [0], [0], [1], [0, 0, 1, 1], [], []>} : vector<2048x36xf32>, vector<36x32xf32>, vector<2048x32xf32> -> vector<2048x32xf32>
    %c0_3 = arith.constant 0 : index
    %c0_4 = arith.constant 0 : index
    %3 = vector.load %arg3[%c0_3, %c0_4] : memref<1x32xf32, #tpu.memory_space<vmem>>, vector<1x32xf32>
    %4 = vector.broadcast %3 : vector<1x32xf32> to vector<2048x32xf32>
    %5 = arith.addf %2, %4 : vector<2048x32xf32>
    %cst_5 = arith.constant 0.000000e+00 : f32
    %6 = vector.broadcast %cst_5 : f32 to vector<2048x32xf32>
    %7 = arith.maximumf %5, %6 : vector<2048x32xf32>
    %8 = vector.shape_cast %7 : vector<2048x32xf32> to vector<8x256x32xf32>
    %cst_6 = arith.constant dense<0.000000e+00> : vector<8x32xf32>
    %9 = vector.multi_reduction <add>, %8, %cst_6 [1] : vector<8x256x32xf32> to vector<8x32xf32>
    %cst_7 = arith.constant 3.906250e-03 : f32
    %10 = vector.broadcast %cst_7 : f32 to vector<8x32xf32>
    %11 = arith.mulf %9, %10 : vector<8x32xf32>
    %c0_8 = arith.constant 0 : index
    %c0_9 = arith.constant 0 : index
    %12 = vector.load %arg4[%c0_8, %c0_9] : memref<32x64xf32, #tpu.memory_space<vmem>>, vector<32x64xf32>
    %cst_10 = arith.constant dense<0.000000e+00> : vector<8x64xf32>
    %13 = tpu.matmul %11, %12, %cst_10 {dimension_numbers = #tpu.dot_dimension_numbers<[1], [0], [0], [1], [0, 0, 1, 1], [], []>} : vector<8x32xf32>, vector<32x64xf32>, vector<8x64xf32> -> vector<8x64xf32>
    %c0_11 = arith.constant 0 : index
    %c0_12 = arith.constant 0 : index
    %14 = vector.load %arg5[%c0_11, %c0_12] : memref<1x64xf32, #tpu.memory_space<vmem>>, vector<1x64xf32>
    %15 = vector.broadcast %14 : vector<1x64xf32> to vector<8x64xf32>
    %16 = arith.addf %13, %15 : vector<8x64xf32>
    %cst_13 = arith.constant 0.000000e+00 : f32
    %17 = vector.broadcast %cst_13 : f32 to vector<8x64xf32>
    %18 = arith.maximumf %16, %17 : vector<8x64xf32>
    %c0_14 = arith.constant 0 : index
    %c0_15 = arith.constant 0 : index
    %19 = vector.load %arg6[%c0_14, %c0_15] : memref<64x128xf32, #tpu.memory_space<vmem>>, vector<64x128xf32>
    %cst_16 = arith.constant dense<0.000000e+00> : vector<8x128xf32>
    %20 = tpu.matmul %18, %19, %cst_16 {dimension_numbers = #tpu.dot_dimension_numbers<[1], [0], [0], [1], [0, 0, 1, 1], [], []>} : vector<8x64xf32>, vector<64x128xf32>, vector<8x128xf32> -> vector<8x128xf32>
    %c0_17 = arith.constant 0 : index
    %c0_18 = arith.constant 0 : index
    %21 = vector.load %arg7[%c0_17, %c0_18] : memref<1x128xf32, #tpu.memory_space<vmem>>, vector<1x128xf32>
    %22 = vector.broadcast %21 : vector<1x128xf32> to vector<8x128xf32>
    %23 = arith.addf %20, %22 : vector<8x128xf32>
    %c0_19 = arith.constant 0 : index
    %c0_20 = arith.constant 0 : index
    %24 = vector.load %arg8[%c0_19, %c0_20] : memref<8x128xf32, #tpu.memory_space<vmem>>, vector<8x128xf32>
    tpu.vector_store %arg8[%c0_19, %c0_20], %23 {strides = array<i32>} : memref<8x128xf32, #tpu.memory_space<vmem>>, vector<8x128xf32>,
    return
  }
  func.func @transform_0(%arg0: i32) -> (i32, i32) {
    %c0_i32 = arith.constant 0 : i32
    %c0_i32_0 = arith.constant 0 : i32
    return %arg0, %c0_i32 : i32, i32
  }
  func.func @transform_1(%arg0: i32) -> (i32, i32) {
    %c0_i32 = arith.constant 0 : i32
    %c0_i32_0 = arith.constant 0 : i32
    %c0_i32_1 = arith.constant 0 : i32
    return %c0_i32, %c0_i32_0 : i32, i32
  }
  func.func @transform_2(%arg0: i32) -> (i32, i32) {
    %c0_i32 = arith.constant 0 : i32
    %c0_i32_0 = arith.constant 0 : i32
    %c0_i32_1 = arith.constant 0 : i32
    return %c0_i32, %c0_i32_0 : i32, i32
  }
  func.func @transform_3(%arg0: i32) -> (i32, i32) {
    %c0_i32 = arith.constant 0 : i32
    %c0_i32_0 = arith.constant 0 : i32
    %c0_i32_1 = arith.constant 0 : i32
    return %c0_i32, %c0_i32_0 : i32, i32
  }
  func.func @transform_4(%arg0: i32) -> (i32, i32) {
    %c0_i32 = arith.constant 0 : i32
    %c0_i32_0 = arith.constant 0 : i32
    %c0_i32_1 = arith.constant 0 : i32
    return %c0_i32, %c0_i32_0 : i32, i32
  }
  func.func @transform_5(%arg0: i32) -> (i32, i32) {
    %c0_i32 = arith.constant 0 : i32
    %c0_i32_0 = arith.constant 0 : i32
    %c0_i32_1 = arith.constant 0 : i32
    return %c0_i32, %c0_i32_0 : i32, i32
  }
  func.func @transform_6(%arg0: i32) -> (i32, i32) {
    %c0_i32 = arith.constant 0 : i32
    %c0_i32_0 = arith.constant 0 : i32
    %c0_i32_1 = arith.constant 0 : i32
    return %c0_i32, %c0_i32_0 : i32, i32
  }
  func.func @transform_7(%arg0: i32) -> (i32, i32) {
    %c0_i32 = arith.constant 0 : i32
    %c0_i32_0 = arith.constant 0 : i32
    return %arg0, %c0_i32 : i32, i32
  }
}

</mosaic_0001>

<llo_original>
// kernel: dann_apply.1
$region0: #{dann_apply.1}
  #allocation0 [shape = 'u32[]', space=smem, size = 0x4, offset = 0x4, fixed_abs, tag = 'smem constant byte address 0x4 - core index']
  #allocation1 [shape = 'u32[144,128]{1,0:T(1,128)}', space=vmem, size = 0x12000, scoped, tag = 'internal scratch']
  %s0 = inlined_call_operand.vmem [shape: f32[2048,36], index: 0, kind: input, shape index: {}]
  %s1 = inlined_call_operand.vmem [shape: f32[36,32], index: 1, kind: input, shape index: {}]
  %s2 = inlined_call_operand.vmem [shape: f32[1,32], index: 2, kind: input, shape index: {}]
  %s3 = inlined_call_operand.vmem [shape: f32[32,64], index: 3, kind: input, shape index: {}]
  %s4 = inlined_call_operand.vmem [shape: f32[1,64], index: 4, kind: input, shape index: {}]
  %s5 = inlined_call_operand.vmem [shape: f32[64,128], index: 5, kind: input, shape index: {}]
  %s6 = inlined_call_operand.vmem [shape: f32[1,128], index: 6, kind: input, shape index: {}]
  %s7 = inlined_call_operand.vmem [shape: f32[8,128], index: 7, kind: output, shape index: {}]
  %s8 = sld [smem:[#allocation0]]
  $region38: #{dann_apply.1} parent=0
    _
  %s10 = ssub.s32 1, %s8
  %s11 = scalar_select 0, %s10, %s8
  // Predicated region
  $region2: #{dann_apply.1} parent=0 // pred_check
    _
  $region3: #{dann_apply.1} parent=0 // pred_check_branch
    %13 = sbr.rel (0) target = $region5
  $region4: #{dann_apply.1} parent=0 // pred_region
    _
  $region5: #{dann_apply.1} parent=0 // pred_fallthru
    _
  // Predicated region
  $region6: #{dann_apply.1} parent=0 // pred_check
    _
  $region7: #{dann_apply.1} parent=0 // pred_check_branch
    %15 = sbr.rel (0) target = $region9
  $region8: #{dann_apply.1} parent=0 // pred_region
    _
  $region9: #{dann_apply.1} parent=0 // pred_fallthru
    _
  // Predicated region
  $region10: #{dann_apply.1} parent=0 // pred_check
    _
  $region11: #{dann_apply.1} parent=0 // pred_check_branch
    %17 = sbr.rel (0) target = $region13
  $region12: #{dann_apply.1} parent=0 // pred_region
    _
  $region13: #{dann_apply.1} parent=0 // pred_fallthru
    _
  // Predicated region
  $region14: #{dann_apply.1} parent=0 // pred_check
    _
  $region15: #{dann_apply.1} parent=0 // pred_check_branch
    %19 = sbr.rel (0) target = $region17
  $region16: #{dann_apply.1} parent=0 // pred_region
    _
  $region17: #{dann_apply.1} parent=0 // pred_fallthru
    _
  // Predicated region
  $region18: #{dann_apply.1} parent=0 // pred_check
    _
  $region19: #{dann_apply.1} parent=0 // pred_check_branch
    %21 = sbr.rel (0) target = $region21
  $region20: #{dann_apply.1} parent=0 // pred_region
    _
  $region21: #{dann_apply.1} parent=0 // pred_fallthru
    _
  // Predicated region
  $region22: #{dann_apply.1} parent=0 // pred_check
    _
  $region23: #{dann_apply.1} parent=0 // pred_check_branch
    %23 = sbr.rel (0) target = $region25
  $region24: #{dann_apply.1} parent=0 // pred_region
    _
  $region25: #{dann_apply.1} parent=0 // pred_fallthru
    _
  // Predicated region
  $region26: #{dann_apply.1} parent=0 // pred_check
    _
  $region27: #{dann_apply.1} parent=0 // pred_check_branch
    %25 = sbr.rel (0) target = $region29
  $region28: #{dann_apply.1} parent=0 // pred_region
    _
  $region29: #{dann_apply.1} parent=0 // pred_fallthru
    _
  %v26 = vld [vmem:[%s0] sm:$0xff]
  %v27 = vld [vmem:[%s0 + $0x8] sm:$0xff]
  %v28 = vld [vmem:[%s0 + $0x10] sm:$0xff]
  %v29 = vld [vmem:[%s0 + $0x18] sm:$0xff]
  %v30 = vld [vmem:[%s0 + $0x20] sm:$0xff]
  %v31 = vld [vmem:[%s0 + $0x28] sm:$0xff]
  %v32 = vld [vmem:[%s0 + $0x30] sm:$0xff]
  %v33 = vld [vmem:[%s0 + $0x38] sm:$0xff]
  %v34 = vld [vmem:[%s0 + $0x40] sm:$0xff]
  %v35 = vld [vmem:[%s0 + $0x48] sm:$0xff]
  %v36 = vld [vmem:[%s0 + $0x50] sm:$0xff]
  %v37 = vld [vmem:[%s0 + $0x58] sm:$0xff]
  %v38 = vld [vmem:[%s0 + $0x60] sm:$0xff]
  %v39 = vld [vmem:[%s0 + $0x68] sm:$0xff]
  %v40 = vld [vmem:[%s0 + $0x70] sm:$0xff]
  %v41 = vld [vmem:[%s0 + $0x78] sm:$0xff]
  %v42 = vld [vmem:[%s0 + $0x80] sm:$0xff]
  %v43 = vld [vmem:[%s0 + $0x88] sm:$0xff]
  %v44 = vld [vmem:[%s0 + $0x90] sm:$0xff]
  %v45 = vld [vmem:[%s0 + $0x98] sm:$0xff]
  %v46 = vld [vmem:[%s0 + $0xa0] sm:$0xff]
  %v47 = vld [vmem:[%s0 + $0xa8] sm:$0xff]
  %v48 = vld [vmem:[%s0 + $0xb0] sm:$0xff]
  %v49 = vld [vmem:[%s0 + $0xb8] sm:$0xff]
  %v50 = vld [vmem:[%s0 + $0xc0] sm:$0xff]
  %v51 = vld [vmem:[%s0 + $0xc8] sm:$0xff]
  %v52 = vld [vmem:[%s0 + $0xd0] sm:$0xff]
  %v53 = vld [vmem:[%s0 + $0xd8] sm:$0xff]
  %v54 = vld [vmem:[%s0 + $0xe0] sm:$0xff]
  %v55 = vld [vmem:[%s0 + $0xe8] sm:$0xff]
  %v56 = vld [vmem:[%s0 + $0xf0] sm:$0xff]
  %v57 = vld [vmem:[%s0 + $0xf8] sm:$0xff]
  %v58 = vld [vmem:[%s0 + $0x100] sm:$0xff]
  %v59 = vld [vmem:[%s0 + $0x108] sm:$0xff]
  %v60 = vld [vmem:[%s0 + $0x110] sm:$0xff]
  %v61 = vld [vmem:[%s0 + $0x118] sm:$0xff]
  %v62 = vld [vmem:[%s0 + $0x120] sm:$0xff]
  %v63 = vld [vmem:[%s0 + $0x128] sm:$0xff]
  %v64 = vld [vmem:[%s0 + $0x130] sm:$0xff]
  %v65 = vld [vmem:[%s0 + $0x138] sm:$0xff]
  %v66 = vld [vmem:[%s0 + $0x140] sm:$0xff]
  %v67 = vld [vmem:[%s0 + $0x148] sm:$0xff]
  %v68 = vld [vmem:[%s0 + $0x150] sm:$0xff]
  %v69 = vld [vmem:[%s0 + $0x158] sm:$0xff]
  %v70 = vld [vmem:[%s0 + $0x160] sm:$0xff]
  %v71 = vld [vmem:[%s0 + $0x168] sm:$0xff]
  %v72 = vld [vmem:[%s0 + $0x170] sm:$0xff]
  %v73 = vld [vmem:[%s0 + $0x178] sm:$0xff]
  %v74 = vld [vmem:[%s0 + $0x180] sm:$0xff]
  %v75 = vld [vmem:[%s0 + $0x188] sm:$0xff]
  %v76 = vld [vmem:[%s0 + $0x190] sm:$0xff]
  %v77 = vld [vmem:[%s0 + $0x198] sm:$0xff]
  %v78 = vld [vmem:[%s0 + $0x1a0] sm:$0xff]
  %v79 = vld [vmem:[%s0 + $0x1a8] sm:$0xff]
  %v80 = vld [vmem:[%s0 + $0x1b0] sm:$0xff]
  %v81 = vld [vmem:[%s0 + $0x1b8] sm:$0xff]
  %v82 = vld [vmem:[%s0 + $0x1c0] sm:$0xff]
  %v83 = vld [vmem:[%s0 + $0x1c8] sm:$0xff]
  %v84 = vld [vmem:[%s0 + $0x1d0] sm:$0xff]
  %v85 = vld [vmem:[%s0 + $0x1d8] sm:$0xff]
  %v86 = vld [vmem:[%s0 + $0x1e0] sm:$0xff]
  %v87 = vld [vmem:[%s0 + $0x1e8] sm:$0xff]
  %v88 = vld [vmem:[%s0 + $0x1f0] sm:$0xff]
  %v89 = vld [vmem:[%s0 + $0x1f8] sm:$0xff]
  %v90 = vld [vmem:[%s0 + $0x200] sm:$0xff]
  %v91 = vld [vmem:[%s0 + $0x208] sm:$0xff]
  %v92 = vld [vmem:[%s0 + $0x210] sm:$0xff]
  %v93 = vld [vmem:[%s0 + $0x218] sm:$0xff]
  %v94 = vld [vmem:[%s0 + $0x220] sm:$0xff]
  %v95 = vld [vmem:[%s0 + $0x228] sm:$0xff]
  %v96 = vld [vmem:[%s0 + $0x230] sm:$0xff]
  %v97 = vld [vmem:[%s0 + $0x238] sm:$0xff]
  %v98 = vld [vmem:[%s0 + $0x240] sm:$0xff]
  %v99 = vld [vmem:[%s0 + $0x248] sm:$0xff]
  %v100 = vld [vmem:[%s0 + $0x250] sm:$0xff]
  %v101 = vld [vmem:[%s0 + $0x258] sm:$0xff]
  %v102 = vld [vmem:[%s0 + $0x260] sm:$0xff]
  %v103 = vld [vmem:[%s0 + $0x268] sm:$0xff]
  %v104 = vld [vmem:[%s0 + $0x270] sm:$0xff]
  %v105 = vld [vmem:[%s0 + $0x278] sm:$0xff]
  %v106 = vld [vmem:[%s0 + $0x280] sm:$0xff]
  %v107 = vld [vmem:[%s0 + $0x288] sm:$0xff]
  %v108 = vld [vmem:[%s0 + $0x290] sm:$0xff]
  %v109 = vld [vmem:[%s0 + $0x298] sm:$0xff]
  %v110 = vld [vmem:[%s0 + $0x2a0] sm:$0xff]
  %v111 = vld [vmem:[%s0 + $0x2a8] sm:$0xff]
  %v112 = vld [vmem:[%s0 + $0x2b0] sm:$0xff]
  %v113 = vld [vmem:[%s0 + $0x2b8] sm:$0xff]
  %v114 = vld [vmem:[%s0 + $0x2c0] sm:$0xff]
  %v115 = vld [vmem:[%s0 + $0x2c8] sm:$0xff]
  %v116 = vld [vmem:[%s0 + $0x2d0] sm:$0xff]
  %v117 = vld [vmem:[%s0 + $0x2d8] sm:$0xff]
  %v118 = vld [vmem:[%s0 + $0x2e0] sm:$0xff]
  %v119 = vld [vmem:[%s0 + $0x2e8] sm:$0xff]
  %v120 = vld [vmem:[%s0 + $0x2f0] sm:$0xff]
  %v121 = vld [vmem:[%s0 + $0x2f8] sm:$0xff]
  %v122 = vld [vmem:[%s0 + $0x300] sm:$0xff]
  %v123 = vld [vmem:[%s0 + $0x308] sm:$0xff]
  %v124 = vld [vmem:[%s0 + $0x310] sm:$0xff]
  %v125 = vld [vmem:[%s0 + $0x318] sm:$0xff]
  %v126 = vld [vmem:[%s0 + $0x320] sm:$0xff]
  %v127 = vld [vmem:[%s0 + $0x328] sm:$0xff]
  %v128 = vld [vmem:[%s0 + $0x330] sm:$0xff]
  %v129 = vld [vmem:[%s0 + $0x338] sm:$0xff]
  %v130 = vld [vmem:[%s0 + $0x340] sm:$0xff]
  %v131 = vld [vmem:[%s0 + $0x348] sm:$0xff]
  %v132 = vld [vmem:[%s0 + $0x350] sm:$0xff]
  %v133 = vld [vmem:[%s0 + $0x358] sm:$0xff]
  %v134 = vld [vmem:[%s0 + $0x360] sm:$0xff]
  %v135 = vld [vmem:[%s0 + $0x368] sm:$0xff]
  %v136 = vld [vmem:[%s0 + $0x370] sm:$0xff]
  %v137 = vld [vmem:[%s0 + $0x378] sm:$0xff]
  %v138 = vld [vmem:[%s0 + $0x380] sm:$0xff]
  %v139 = vld [vmem:[%s0 + $0x388] sm:$0xff]
  %v140 = vld [vmem:[%s0 + $0x390] sm:$0xff]
  %v141 = vld [vmem:[%s0 + $0x398] sm:$0xff]
  %v142 = vld [vmem:[%s0 + $0x3a0] sm:$0xff]
  %v143 = vld [vmem:[%s0 + $0x3a8] sm:$0xff]
  %v144 = vld [vmem:[%s0 + $0x3b0] sm:$0xff]
  %v145 = vld [vmem:[%s0 + $0x3b8] sm:$0xff]
  %v146 = vld [vmem:[%s0 + $0x3c0] sm:$0xff]
  %v147 = vld [vmem:[%s0 + $0x3c8] sm:$0xff]
  %v148 = vld [vmem:[%s0 + $0x3d0] sm:$0xff]
  %v149 = vld [vmem:[%s0 + $0x3d8] sm:$0xff]
  %v150 = vld [vmem:[%s0 + $0x3e0] sm:$0xff]
  %v151 = vld [vmem:[%s0 + $0x3e8] sm:$0xff]
  %v152 = vld [vmem:[%s0 + $0x3f0] sm:$0xff]
  %v153 = vld [vmem:[%s0 + $0x3f8] sm:$0xff]
  %v154 = vld [vmem:[%s0 + $0x400] sm:$0xff]
  %v155 = vld [vmem:[%s0 + $0x408] sm:$0xff]
  %v156 = vld [vmem:[%s0 + $0x410] sm:$0xff]
  %v157 = vld [vmem:[%s0 + $0x418] sm:$0xff]
  %v158 = vld [vmem:[%s0 + $0x420] sm:$0xff]
  %v159 = vld [vmem:[%s0 + $0x428] sm:$0xff]
  %v160 = vld [vmem:[%s0 + $0x430] sm:$0xff]
  %v161 = vld [vmem:[%s0 + $0x438] sm:$0xff]
  %v162 = vld [vmem:[%s0 + $0x440] sm:$0xff]
  %v163 = vld [vmem:[%s0 + $0x448] sm:$0xff]
  %v164 = vld [vmem:[%s0 + $0x450] sm:$0xff]
  %v165 = vld [vmem:[%s0 + $0x458] sm:$0xff]
  %v166 = vld [vmem:[%s0 + $0x460] sm:$0xff]
  %v167 = vld [vmem:[%s0 + $0x468] sm:$0xff]
  %v168 = vld [vmem:[%s0 + $0x470] sm:$0xff]
  %v169 = vld [vmem:[%s0 + $0x478] sm:$0xff]
  %v170 = vld [vmem:[%s0 + $0x480] sm:$0xff]
  %v171 = vld [vmem:[%s0 + $0x488] sm:$0xff]
  %v172 = vld [vmem:[%s0 + $0x490] sm:$0xff]
  %v173 = vld [vmem:[%s0 + $0x498] sm:$0xff]
  %v174 = vld [vmem:[%s0 + $0x4a0] sm:$0xff]
  %v175 = vld [vmem:[%s0 + $0x4a8] sm:$0xff]
  %v176 = vld [vmem:[%s0 + $0x4b0] sm:$0xff]
  %v177 = vld [vmem:[%s0 + $0x4b8] sm:$0xff]
  %v178 = vld [vmem:[%s0 + $0x4c0] sm:$0xff]
  %v179 = vld [vmem:[%s0 + $0x4c8] sm:$0xff]
  %v180 = vld [vmem:[%s0 + $0x4d0] sm:$0xff]
  %v181 = vld [vmem:[%s0 + $0x4d8] sm:$0xff]
  %v182 = vld [vmem:[%s0 + $0x4e0] sm:$0xff]
  %v183 = vld [vmem:[%s0 + $0x4e8] sm:$0xff]
  %v184 = vld [vmem:[%s0 + $0x4f0] sm:$0xff]
  %v185 = vld [vmem:[%s0 + $0x4f8] sm:$0xff]
  %v186 = vld [vmem:[%s0 + $0x500] sm:$0xff]
  %v187 = vld [vmem:[%s0 + $0x508] sm:$0xff]
  %v188 = vld [vmem:[%s0 + $0x510] sm:$0xff]
  %v189 = vld [vmem:[%s0 + $0x518] sm:$0xff]
  %v190 = vld [vmem:[%s0 + $0x520] sm:$0xff]
  %v191 = vld [vmem:[%s0 + $0x528] sm:$0xff]
  %v192 = vld [vmem:[%s0 + $0x530] sm:$0xff]
  %v193 = vld [vmem:[%s0 + $0x538] sm:$0xff]
  %v194 = vld [vmem:[%s0 + $0x540] sm:$0xff]
  %v195 = vld [vmem:[%s0 + $0x548] sm:$0xff]
  %v196 = vld [vmem:[%s0 + $0x550] sm:$0xff]
  %v197 = vld [vmem:[%s0 + $0x558] sm:$0xff]
  %v198 = vld [vmem:[%s0 + $0x560] sm:$0xff]
  %v199 = vld [vmem:[%s0 + $0x568] sm:$0xff]
  %v200 = vld [vmem:[%s0 + $0x570] sm:$0xff]
  %v201 = vld [vmem:[%s0 + $0x578] sm:$0xff]
  %v202 = vld [vmem:[%s0 + $0x580] sm:$0xff]
  %v203 = vld [vmem:[%s0 + $0x588] sm:$0xff]
  %v204 = vld [vmem:[%s0 + $0x590] sm:$0xff]
  %v205 = vld [vmem:[%s0 + $0x598] sm:$0xff]
  %v206 = vld [vmem:[%s0 + $0x5a0] sm:$0xff]
  %v207 = vld [vmem:[%s0 + $0x5a8] sm:$0xff]
  %v208 = vld [vmem:[%s0 + $0x5b0] sm:$0xff]
  %v209 = vld [vmem:[%s0 + $0x5b8] sm:$0xff]
  %v210 = vld [vmem:[%s0 + $0x5c0] sm:$0xff]
  %v211 = vld [vmem:[%s0 + $0x5c8] sm:$0xff]
  %v212 = vld [vmem:[%s0 + $0x5d0] sm:$0xff]
  %v213 = vld [vmem:[%s0 + $0x5d8] sm:$0xff]
  %v214 = vld [vmem:[%s0 + $0x5e0] sm:$0xff]
  %v215 = vld [vmem:[%s0 + $0x5e8] sm:$0xff]
  %v216 = vld [vmem:[%s0 + $0x5f0] sm:$0xff]
  %v217 = vld [vmem:[%s0 + $0x5f8] sm:$0xff]
  %v218 = vld [vmem:[%s0 + $0x600] sm:$0xff]
  %v219 = vld [vmem:[%s0 + $0x608] sm:$0xff]
  %v220 = vld [vmem:[%s0 + $0x610] sm:$0xff]
  %v221 = vld [vmem:[%s0 + $0x618] sm:$0xff]
  %v222 = vld [vmem:[%s0 + $0x620] sm:$0xff]
  %v223 = vld [vmem:[%s0 + $0x628] sm:$0xff]
  %v224 = vld [vmem:[%s0 + $0x630] sm:$0xff]
  %v225 = vld [vmem:[%s0 + $0x638] sm:$0xff]
  %v226 = vld [vmem:[%s0 + $0x640] sm:$0xff]
  %v227 = vld [vmem:[%s0 + $0x648] sm:$0xff]
  %v228 = vld [vmem:[%s0 + $0x650] sm:$0xff]
  %v229 = vld [vmem:[%s0 + $0x658] sm:$0xff]
  %v230 = vld [vmem:[%s0 + $0x660] sm:$0xff]
  %v231 = vld [vmem:[%s0 + $0x668] sm:$0xff]
  %v232 = vld [vmem:[%s0 + $0x670] sm:$0xff]
  %v233 = vld [vmem:[%s0 + $0x678] sm:$0xff]
  %v234 = vld [vmem:[%s0 + $0x680] sm:$0xff]
  %v235 = vld [vmem:[%s0 + $0x688] sm:$0xff]
  %v236 = vld [vmem:[%s0 + $0x690] sm:$0xff]
  %v237 = vld [vmem:[%s0 + $0x698] sm:$0xff]
  %v238 = vld [vmem:[%s0 + $0x6a0] sm:$0xff]
  %v239 = vld [vmem:[%s0 + $0x6a8] sm:$0xff]
  %v240 = vld [vmem:[%s0 + $0x6b0] sm:$0xff]
  %v241 = vld [vmem:[%s0 + $0x6b8] sm:$0xff]
  %v242 = vld [vmem:[%s0 + $0x6c0] sm:$0xff]
  %v243 = vld [vmem:[%s0 + $0x6c8] sm:$0xff]
  %v244 = vld [vmem:[%s0 + $0x6d0] sm:$0xff]
  %v245 = vld [vmem:[%s0 + $0x6d8] sm:$0xff]
  %v246 = vld [vmem:[%s0 + $0x6e0] sm:$0xff]
  %v247 = vld [vmem:[%s0 + $0x6e8] sm:$0xff]
  %v248 = vld [vmem:[%s0 + $0x6f0] sm:$0xff]
  %v249 = vld [vmem:[%s0 + $0x6f8] sm:$0xff]
  %v250 = vld [vmem:[%s0 + $0x700] sm:$0xff]
  %v251 = vld [vmem:[%s0 + $0x708] sm:$0xff]
  %v252 = vld [vmem:[%s0 + $0x710] sm:$0xff]
  %v253 = vld [vmem:[%s0 + $0x718] sm:$0xff]
  %v254 = vld [vmem:[%s0 + $0x720] sm:$0xff]
  %v255 = vld [vmem:[%s0 + $0x728] sm:$0xff]
  %v256 = vld [vmem:[%s0 + $0x730] sm:$0xff]
  %v257 = vld [vmem:[%s0 + $0x738] sm:$0xff]
  %v258 = vld [vmem:[%s0 + $0x740] sm:$0xff]
  %v259 = vld [vmem:[%s0 + $0x748] sm:$0xff]
  %v260 = vld [vmem:[%s0 + $0x750] sm:$0xff]
  %v261 = vld [vmem:[%s0 + $0x758] sm:$0xff]
  %v262 = vld [vmem:[%s0 + $0x760] sm:$0xff]
  %v263 = vld [vmem:[%s0 + $0x768] sm:$0xff]
  %v264 = vld [vmem:[%s0 + $0x770] sm:$0xff]
  %v265 = vld [vmem:[%s0 + $0x778] sm:$0xff]
  %v266 = vld [vmem:[%s0 + $0x780] sm:$0xff]
  %v267 = vld [vmem:[%s0 + $0x788] sm:$0xff]
  %v268 = vld [vmem:[%s0 + $0x790] sm:$0xff]
  %v269 = vld [vmem:[%s0 + $0x798] sm:$0xff]
  %v270 = vld [vmem:[%s0 + $0x7a0] sm:$0xff]
  %v271 = vld [vmem:[%s0 + $0x7a8] sm:$0xff]
  %v272 = vld [vmem:[%s0 + $0x7b0] sm:$0xff]
  %v273 = vld [vmem:[%s0 + $0x7b8] sm:$0xff]
  %v274 = vld [vmem:[%s0 + $0x7c0] sm:$0xff]
  %v275 = vld [vmem:[%s0 + $0x7c8] sm:$0xff]
  %v276 = vld [vmem:[%s0 + $0x7d0] sm:$0xff]
  %v277 = vld [vmem:[%s0 + $0x7d8] sm:$0xff]
  %v278 = vld [vmem:[%s0 + $0x7e0] sm:$0xff]
  %v279 = vld [vmem:[%s0 + $0x7e8] sm:$0xff]
  %v280 = vld [vmem:[%s0 + $0x7f0] sm:$0xff]
  %v281 = vld [vmem:[%s0 + $0x7f8] sm:$0xff]
  %v282 = vld [vmem:[%s1] sm:$0xff]
  %v283 = vld [vmem:[%s1 + $0x8] sm:$0xff]
  %v284 = vld [vmem:[%s1 + $0x10] sm:$0xff]
  %v285 = vld [vmem:[%s1 + $0x18] sm:$0xff]
  %v286 = vld [vmem:[%s1 + $0x20] sm:$0xf]
  %v287 = vld [vmem:[%s2] sm:$0x1]
  %v289 = vlaneseq
  %v290 = vshrl.u32 %v289, 7
  %v291 = vsub.s32 0, %v290
  %v292 = vrot.slane %v287, %v291
  %vm294 = vcmask 293888
  %v296 = vsel %vm294, %v26, 0
  %v299 = vsel %vm294, %v27, 0
  %v302 = vsel %vm294, %v28, 0
  %v305 = vsel %vm294, %v29, 0
  %v308 = vsel %vm294, %v30, 0
  %v311 = vsel %vm294, %v31, 0
  %v314 = vsel %vm294, %v32, 0
  %v317 = vsel %vm294, %v33, 0
  %v320 = vsel %vm294, %v34, 0
  %v323 = vsel %vm294, %v35, 0
  %v326 = vsel %vm294, %v36, 0
  %v329 = vsel %vm294, %v37, 0
  %v332 = vsel %vm294, %v38, 0
  %v335 = vsel %vm294, %v39, 0
  %v338 = vsel %vm294, %v40, 0
  %v341 = vsel %vm294, %v41, 0
  %v344 = vsel %vm294, %v42, 0
  %v347 = vsel %vm294, %v43, 0
  %v350 = vsel %vm294, %v44, 0
  %v353 = vsel %vm294, %v45, 0
  %v356 = vsel %vm294, %v46, 0
  %v359 = vsel %vm294, %v47, 0
  %v362 = vsel %vm294, %v48, 0
  %v365 = vsel %vm294, %v49, 0
  %v368 = vsel %vm294, %v50, 0
  %v371 = vsel %vm294, %v51, 0
  %v374 = vsel %vm294, %v52, 0
  %v377 = vsel %vm294, %v53, 0
  %v380 = vsel %vm294, %v54, 0
  %v383 = vsel %vm294, %v55, 0
  %v386 = vsel %vm294, %v56, 0
  %v389 = vsel %vm294, %v57, 0
  %v392 = vsel %vm294, %v58, 0
  %v395 = vsel %vm294, %v59, 0
  %v398 = vsel %vm294, %v60, 0
  %v401 = vsel %vm294, %v61, 0
  %v404 = vsel %vm294, %v62, 0
  %v407 = vsel %vm294, %v63, 0
  %v410 = vsel %vm294, %v64, 0
  %v413 = vsel %vm294, %v65, 0
  %v416 = vsel %vm294, %v66, 0
  %v419 = vsel %vm294, %v67, 0
  %v422 = vsel %vm294, %v68, 0
  %v425 = vsel %vm294, %v69, 0
  %v428 = vsel %vm294, %v70, 0
  %v431 = vsel %vm294, %v71, 0
  %v434 = vsel %vm294, %v72, 0
  %v437 = vsel %vm294, %v73, 0
  %v440 = vsel %vm294, %v74, 0
  %v443 = vsel %vm294, %v75, 0
  %v446 = vsel %vm294, %v76, 0
  %v449 = vsel %vm294, %v77, 0
  %v452 = vsel %vm294, %v78, 0
  %v455 = vsel %vm294, %v79, 0
  %v458 = vsel %vm294, %v80, 0
  %v461 = vsel %vm294, %v81, 0
  %v464 = vsel %vm294, %v82, 0
  %v467 = vsel %vm294, %v83, 0
  %v470 = vsel %vm294, %v84, 0
  %v473 = vsel %vm294, %v85, 0
  %v476 = vsel %vm294, %v86, 0
  %v479 = vsel %vm294, %v87, 0
  %v482 = vsel %vm294, %v88, 0
  %v485 = vsel %vm294, %v89, 0
  %v488 = vsel %vm294, %v90, 0
  %v491 = vsel %vm294, %v91, 0
  %v494 = vsel %vm294, %v92, 0
  %v497 = vsel %vm294, %v93, 0
  %v500 = vsel %vm294, %v94, 0
  %v503 = vsel %vm294, %v95, 0
  %v506 = vsel %vm294, %v96, 0
  %v509 = vsel %vm294, %v97, 0
  %v512 = vsel %vm294, %v98, 0
  %v515 = vsel %vm294, %v99, 0
  %v518 = vsel %vm294, %v100, 0
  %v521 = vsel %vm294, %v101, 0
  %v524 = vsel %vm294, %v102, 0
  %v527 = vsel %vm294, %v103, 0
  %v530 = vsel %vm294, %v104, 0
  %v533 = vsel %vm294, %v105, 0
  %v536 = vsel %vm294, %v106, 0
  %v539 = vsel %vm294, %v107, 0
  %v542 = vsel %vm294, %v108, 0
  %v545 = vsel %vm294, %v109, 0
  %v548 = vsel %vm294, %v110, 0
  %v551 = vsel %vm294, %v111, 0
  %v554 = vsel %vm294, %v112, 0
  %v557 = vsel %vm294, %v113, 0
  %v560 = vsel %vm294, %v114, 0
  %v563 = vsel %vm294, %v115, 0
  %v566 = vsel %vm294, %v116, 0
  %v569 = vsel %vm294, %v117, 0
  %v572 = vsel %vm294, %v118, 0
  %v575 = vsel %vm294, %v119, 0
  %v578 = vsel %vm294, %v120, 0
  %v581 = vsel %vm294, %v121, 0
  %v584 = vsel %vm294, %v122, 0
  %v587 = vsel %vm294, %v123, 0
  %v590 = vsel %vm294, %v124, 0
  %v593 = vsel %vm294, %v125, 0
  %v596 = vsel %vm294, %v126, 0
  %v599 = vsel %vm294, %v127, 0
  %v602 = vsel %vm294, %v128, 0
  %v605 = vsel %vm294, %v129, 0
  %v608 = vsel %vm294, %v130, 0
  %v611 = vsel %vm294, %v131, 0
  %v614 = vsel %vm294, %v132, 0
  %v617 = vsel %vm294, %v133, 0
  %v620 = vsel %vm294, %v134, 0
  %v623 = vsel %vm294, %v135, 0
  %v626 = vsel %vm294, %v136, 0
  %v629 = vsel %vm294, %v137, 0
  %v632 = vsel %vm294, %v138, 0
  %v635 = vsel %vm294, %v139, 0
  %v638 = vsel %vm294, %v140, 0
  %v641 = vsel %vm294, %v141, 0
  %v644 = vsel %vm294, %v142, 0
  %v647 = vsel %vm294, %v143, 0
  %v650 = vsel %vm294, %v144, 0
  %v653 = vsel %vm294, %v145, 0
  %v656 = vsel %vm294, %v146, 0
  %v659 = vsel %vm294, %v147, 0
  %v662 = vsel %vm294, %v148, 0
  %v665 = vsel %vm294, %v149, 0
  %v668 = vsel %vm294, %v150, 0
  %v671 = vsel %vm294, %v151, 0
  %v674 = vsel %vm294, %v152, 0
  %v677 = vsel %vm294, %v153, 0
  %v680 = vsel %vm294, %v154, 0
  %v683 = vsel %vm294, %v155, 0
  %v686 = vsel %vm294, %v156, 0
  %v689 = vsel %vm294, %v157, 0
  %v692 = vsel %vm294, %v158, 0
  %v695 = vsel %vm294, %v159, 0
  %v698 = vsel %vm294, %v160, 0
  %v701 = vsel %vm294, %v161, 0
  %v704 = vsel %vm294, %v162, 0
  %v707 = vsel %vm294, %v163, 0
  %v710 = vsel %vm294, %v164, 0
  %v713 = vsel %vm294, %v165, 0
  %v716 = vsel %vm294, %v166, 0
  %v719 = vsel %vm294, %v167, 0
  %v722 = vsel %vm294, %v168, 0
  %v725 = vsel %vm294, %v169, 0
  %v728 = vsel %vm294, %v170, 0
  %v731 = vsel %vm294, %v171, 0
  %v734 = vsel %vm294, %v172, 0
  %v737 = vsel %vm294, %v173, 0
  %v740 = vsel %vm294, %v174, 0
  %v743 = vsel %vm294, %v175, 0
  %v746 = vsel %vm294, %v176, 0
  %v749 = vsel %vm294, %v177, 0
  %v752 = vsel %vm294, %v178, 0
  %v755 = vsel %vm294, %v179, 0
  %v758 = vsel %vm294, %v180, 0
  %v761 = vsel %vm294, %v181, 0
  %v764 = vsel %vm294, %v182, 0
  %v767 = vsel %vm294, %v183, 0
  %v770 = vsel %vm294, %v184, 0
  %v773 = vsel %vm294, %v185, 0
  %v776 = vsel %vm294, %v186, 0
  %v779 = vsel %vm294, %v187, 0
  %v782 = vsel %vm294, %v188, 0
  %v785 = vsel %vm294, %v189, 0
  %v788 = vsel %vm294, %v190, 0
  %v791 = vsel %vm294, %v191, 0
  %v794 = vsel %vm294, %v192, 0
  %v797 = vsel %vm294, %v193, 0
  %v800 = vsel %vm294, %v194, 0
  %v803 = vsel %vm294, %v195, 0
  %v806 = vsel %vm294, %v196, 0
  %v809 = vsel %vm294, %v197, 0
  %v812 = vsel %vm294, %v198, 0
  %v815 = vsel %vm294, %v199, 0
  %v818 = vsel %vm294, %v200, 0
  %v821 = vsel %vm294, %v201, 0
  %v824 = vsel %vm294, %v202, 0
  %v827 = vsel %vm294, %v203, 0
  %v830 = vsel %vm294, %v204, 0
  %v833 = vsel %vm294, %v205, 0
  %v836 = vsel %vm294, %v206, 0
  %v839 = vsel %vm294, %v207, 0
  %v842 = vsel %vm294, %v208, 0
  %v845 = vsel %vm294, %v209, 0
  %v848 = vsel %vm294, %v210, 0
  %v851 = vsel %vm294, %v211, 0
  %v854 = vsel %vm294, %v212, 0
  %v857 = vsel %vm294, %v213, 0
  %v860 = vsel %vm294, %v214, 0
  %v863 = vsel %vm294, %v215, 0
  %v866 = vsel %vm294, %v216, 0
  %v869 = vsel %vm294, %v217, 0
  %v872 = vsel %vm294, %v218, 0
  %v875 = vsel %vm294, %v219, 0
  %v878 = vsel %vm294, %v220, 0
  %v881 = vsel %vm294, %v221, 0
  %v884 = vsel %vm294, %v222, 0
  %v887 = vsel %vm294, %v223, 0
  %v890 = vsel %vm294, %v224, 0
  %v893 = vsel %vm294, %v225, 0
  %v896 = vsel %vm294, %v226, 0
  %v899 = vsel %vm294, %v227, 0
  %v902 = vsel %vm294, %v228, 0
  %v905 = vsel %vm294, %v229, 0
  %v908 = vsel %vm294, %v230, 0
  %v911 = vsel %vm294, %v231, 0
  %v914 = vsel %vm294, %v232, 0
  %v917 = vsel %vm294, %v233, 0
  %v920 = vsel %vm294, %v234, 0
  %v923 = vsel %vm294, %v235, 0
  %v926 = vsel %vm294, %v236, 0
  %v929 = vsel %vm294, %v237, 0
  %v932 = vsel %vm294, %v238, 0
  %v935 = vsel %vm294, %v239, 0
  %v938 = vsel %vm294, %v240, 0
  %v941 = vsel %vm294, %v241, 0
  %v944 = vsel %vm294, %v242, 0
  %v947 = vsel %vm294, %v243, 0
  %v950 = vsel %vm294, %v244, 0
  %v953 = vsel %vm294, %v245, 0
  %v956 = vsel %vm294, %v246, 0
  %v959 = vsel %vm294, %v247, 0
  %v962 = vsel %vm294, %v248, 0
  %v965 = vsel %vm294, %v249, 0
  %v968 = vsel %vm294, %v250, 0
  %v971 = vsel %vm294, %v251, 0
  %v974 = vsel %vm294, %v252, 0
  %v977 = vsel %vm294, %v253, 0
  %v980 = vsel %vm294, %v254, 0
  %v983 = vsel %vm294, %v255, 0
  %v986 = vsel %vm294, %v256, 0
  %v989 = vsel %vm294, %v257, 0
  %v992 = vsel %vm294, %v258, 0
  %v995 = vsel %vm294, %v259, 0
  %v998 = vsel %vm294, %v260, 0
  %v1001 = vsel %vm294, %v261, 0
  %v1004 = vsel %vm294, %v262, 0
  %v1007 = vsel %vm294, %v263, 0
  %v1010 = vsel %vm294, %v264, 0
  %v1013 = vsel %vm294, %v265, 0
  %v1016 = vsel %vm294, %v266, 0
  %v1019 = vsel %vm294, %v267, 0
  %v1022 = vsel %vm294, %v268, 0
  %v1025 = vsel %vm294, %v269, 0
  %v1028 = vsel %vm294, %v270, 0
  %v1031 = vsel %vm294, %v271, 0
  %v1034 = vsel %vm294, %v272, 0
  %v1037 = vsel %vm294, %v273, 0
  %v1040 = vsel %vm294, %v274, 0
  %v1043 = vsel %vm294, %v275, 0
  %v1046 = vsel %vm294, %v276, 0
  %v1049 = vsel %vm294, %v277, 0
  %v1052 = vsel %vm294, %v278, 0
  %v1055 = vsel %vm294, %v279, 0
  %v1058 = vsel %vm294, %v280, 0
  %v1061 = vsel %vm294, %v281, 0
  %vm1063 = vcmask 1043456
  %v1065 = vsel %vm1063, %v286, 0
  %1067 = vmatprep.subr.mxu0 0.0
  %1068 = vmatpush1.msra.mxu0 0.0
  %1069 = vmatprep.subr.mxu0 0.0
  %1070 = vmatpush1.msra.mxu0 0.0
  %1071 = vmatprep.subr.mxu0 0.0
  %1072 = vmatpush1.msra.mxu0 0.0
  %1073 = vmatprep.subr.mxu0 0.0
  %1074 = vmatpush1.msra.mxu0 0.0
  %1075 = vmatprep.subr.mxu0 0.0
  %1076 = vmatpush1.msra.mxu0 0.0
  %1077 = vmatprep.subr.mxu0 0.0
  %1078 = vmatpush1.msra.mxu0 0.0
  %1079 = vmatprep.subr.mxu0 0.0
  %1080 = vmatpush1.msra.mxu0 0.0
  %1081 = vmatprep.subr.mxu0 0.0
  %1082 = vmatpush1.msra.mxu0 0.0
  %1083 = vmatprep.subr.mxu0 0.0
  %1084 = vmatpush1.msra.mxu0 0.0
  %1085 = vmatprep.subr.mxu0 0.0
  %1086 = vmatpush1.msra.mxu0 0.0
  %1087 = vmatprep.subr.mxu0 0.0
  %1088 = vmatpush1.msra.mxu0 0.0
  %1089 = vmatprep.subr.mxu0 0.0
  %1090 = vmatpush1.msra.mxu0 %v1065
  %1091 = vmatprep.subr.mxu0 0.0
  %1092 = vmatpush1.msra.mxu0 %v285
  %1093 = vmatprep.subr.mxu0 0.0
  %1094 = vmatpush1.msra.mxu0 %v284
  %1095 = vmatprep.subr.mxu0 0.0
  %1096 = vmatpush1.msra.mxu0 %v283
  %1097 = vmatprep.subr.mxu0 0.0
  %1098 = vmatpush1.msra.mxu0 %v282
  %1099 = vmatprep.subr.mxu0 0.0
  %1100 = vmatpush2.msra.mxu0 0.0
  %1101 = vmatprep.subr.mxu0 0.0
  %1102 = vmatpush2.msra.mxu0 0.0
  %1103 = vmatprep.subr.mxu0 0.0
  %1104 = vmatpush2.msra.mxu0 0.0
  %1105 = vmatprep.subr.mxu0 0.0
  %1106 = vmatpush2.msra.mxu0 0.0
  %1107 = vmatprep.subr.mxu0 0.0
  %1108 = vmatpush2.msra.mxu0 0.0
  %1109 = vmatprep.subr.mxu0 0.0
  %1110 = vmatpush2.msra.mxu0 0.0
  %1111 = vmatprep.subr.mxu0 0.0
  %1112 = vmatpush2.msra.mxu0 0.0
  %1113 = vmatprep.subr.mxu0 0.0
  %1114 = vmatpush2.msra.mxu0 0.0
  %1115 = vmatprep.subr.mxu0 0.0
  %1116 = vmatpush2.msra.mxu0 0.0
  %1117 = vmatprep.subr.mxu0 0.0
  %1118 = vmatpush2.msra.mxu0 0.0
  %1119 = vmatprep.subr.mxu0 0.0
  %1120 = vmatpush2.msra.mxu0 0.0
  %1121 = vmatprep.subr.mxu0 0.0
  %1122 = vmatpush2.msra.mxu0 0.0
  %1123 = vmatprep.subr.mxu0 0.0
  %1124 = vmatpush2.msra.mxu0 0.0
  %1125 = vmatprep.subr.mxu0 0.0
  %1126 = vmatpush2.msra.mxu0 0.0
  %1127 = vmatprep.subr.mxu0 0.0
  %1128 = vmatpush2.msra.mxu0 0.0
  %1129 = vmatprep.subr.mxu0 0.0
  %1130 = vmatpush2.msra.mxu0 0.0
  %1131 = vmatprep.mubr.f32.mxu0 0.0
  %1132 = vmatmul.mubr.f32.gmra.mxu0 %v296
  %v1133 = vpop.f32.mrf.mxu0
  %v1134 = vadd.f32 %v292, %v1133
  %v1135 = vpop.f32.mrf.mxu0
  %1136 = vmatprep.mubr.f32.mxu0 0.0
  %1137 = vmatmul.mubr.f32.gmra.mxu0 %v299
  %v1138 = vpop.f32.mrf.mxu0
  %v1139 = vadd.f32 %v292, %v1138
  %v1140 = vpop.f32.mrf.mxu0
  %1141 = vmatprep.mubr.f32.mxu0 0.0
  %1142 = vmatmul.mubr.f32.gmra.mxu0 %v302
  %v1143 = vpop.f32.mrf.mxu0
  %v1144 = vadd.f32 %v292, %v1143
  %v1145 = vpop.f32.mrf.mxu0
  %1146 = vmatprep.mubr.f32.mxu0 0.0
  %1147 = vmatmul.mubr.f32.gmra.mxu0 %v305
  %v1148 = vpop.f32.mrf.mxu0
  %v1149 = vadd.f32 %v292, %v1148
  %v1150 = vpop.f32.mrf.mxu0
  %1151 = vmatprep.mubr.f32.mxu0 0.0
  %1152 = vmatmul.mubr.f32.gmra.mxu0 %v308
  %v1153 = vpop.f32.mrf.mxu0
  %v1154 = vadd.f32 %v292, %v1153
  %v1155 = vpop.f32.mrf.mxu0
  %1156 = vmatprep.mubr.f32.mxu0 0.0
  %1157 = vmatmul.mubr.f32.gmra.mxu0 %v311
  %v1158 = vpop.f32.mrf.mxu0
  %v1159 = vadd.f32 %v292, %v1158
  %v1160 = vpop.f32.mrf.mxu0
  %1161 = vmatprep.mubr.f32.mxu0 0.0
  %1162 = vmatmul.mubr.f32.gmra.mxu0 %v314
  %v1163 = vpop.f32.mrf.mxu0
  %v1164 = vadd.f32 %v292, %v1163
  %v1165 = vpop.f32.mrf.mxu0
  %1166 = vmatprep.mubr.f32.mxu0 0.0
  %1167 = vmatmul.mubr.f32.gmra.mxu0 %v317
  %v1168 = vpop.f32.mrf.mxu0
  %v1169 = vadd.f32 %v292, %v1168
  %v1170 = vpop.f32.mrf.mxu0
  %1171 = vmatprep.mubr.f32.mxu0 0.0
  %1172 = vmatmul.mubr.f32.gmra.mxu0 %v320
  %v1173 = vpop.f32.mrf.mxu0
  %v1174 = vadd.f32 %v292, %v1173
  %v1175 = vpop.f32.mrf.mxu0
  %1176 = vmatprep.mubr.f32.mxu0 0.0
  %1177 = vmatmul.mubr.f32.gmra.mxu0 %v323
  %v1178 = vpop.f32.mrf.mxu0
  %v1179 = vadd.f32 %v292, %v1178
  %v1180 = vpop.f32.mrf.mxu0
  %1181 = vmatprep.mubr.f32.mxu0 0.0
  %1182 = vmatmul.mubr.f32.gmra.mxu0 %v326
  %v1183 = vpop.f32.mrf.mxu0
  %v1184 = vadd.f32 %v292, %v1183
  %v1185 = vpop.f32.mrf.mxu0
  %1186 = vmatprep.mubr.f32.mxu0 0.0
  %1187 = vmatmul.mubr.f32.gmra.mxu0 %v329
  %v1188 = vpop.f32.mrf.mxu0
  %v1189 = vadd.f32 %v292, %v1188
  %v1190 = vpop.f32.mrf.mxu0
  %1191 = vmatprep.mubr.f32.mxu0 0.0
  %1192 = vmatmul.mubr.f32.gmra.mxu0 %v332
  %v1193 = vpop.f32.mrf.mxu0
  %v1194 = vadd.f32 %v292, %v1193
  %v1195 = vpop.f32.mrf.mxu0
  %1196 = vmatprep.mubr.f32.mxu0 0.0
  %1197 = vmatmul.mubr.f32.gmra.mxu0 %v335
  %v1198 = vpop.f32.mrf.mxu0
  %v1199 = vadd.f32 %v292, %v1198
  %v1200 = vpop.f32.mrf.mxu0
  %1201 = vmatprep.mubr.f32.mxu0 0.0
  %1202 = vmatmul.mubr.f32.gmra.mxu0 %v338
  %v1203 = vpop.f32.mrf.mxu0
  %v1204 = vadd.f32 %v292, %v1203
  %v1205 = vpop.f32.mrf.mxu0
  %1206 = vmatprep.mubr.f32.mxu0 0.0
  %1207 = vmatmul.mubr.f32.gmra.mxu0 %v341
  %v1208 = vpop.f32.mrf.mxu0
  %v1209 = vadd.f32 %v292, %v1208
  %v1210 = vpop.f32.mrf.mxu0
  %1211 = vmatprep.mubr.f32.mxu0 0.0
  %1212 = vmatmul.mubr.f32.gmra.mxu0 %v344
  %v1213 = vpop.f32.mrf.mxu0
  %v1214 = vadd.f32 %v292, %v1213
  %v1215 = vpop.f32.mrf.mxu0
  %1216 = vmatprep.mubr.f32.mxu0 0.0
  %1217 = vmatmul.mubr.f32.gmra.mxu0 %v347
  %v1218 = vpop.f32.mrf.mxu0
  %v1219 = vadd.f32 %v292, %v1218
  %v1220 = vpop.f32.mrf.mxu0
  %1221 = vmatprep.mubr.f32.mxu0 0.0
  %1222 = vmatmul.mubr.f32.gmra.mxu0 %v350
  %v1223 = vpop.f32.mrf.mxu0
  %v1224 = vadd.f32 %v292, %v1223
  %v1225 = vpop.f32.mrf.mxu0
  %1226 = vmatprep.mubr.f32.mxu0 0.0
  %1227 = vmatmul.mubr.f32.gmra.mxu0 %v353
  %v1228 = vpop.f32.mrf.mxu0
  %v1229 = vadd.f32 %v292, %v1228
  %v1230 = vpop.f32.mrf.mxu0
  %1231 = vmatprep.mubr.f32.mxu0 0.0
  %1232 = vmatmul.mubr.f32.gmra.mxu0 %v356
  %v1233 = vpop.f32.mrf.mxu0
  %v1234 = vadd.f32 %v292, %v1233
  %v1235 = vpop.f32.mrf.mxu0
  %1236 = vmatprep.mubr.f32.mxu0 0.0
  %1237 = vmatmul.mubr.f32.gmra.mxu0 %v359
  %v1238 = vpop.f32.mrf.mxu0
  %v1239 = vadd.f32 %v292, %v1238
  %v1240 = vpop.f32.mrf.mxu0
  %1241 = vmatprep.mubr.f32.mxu0 0.0
  %1242 = vmatmul.mubr.f32.gmra.mxu0 %v362
  %v1243 = vpop.f32.mrf.mxu0
  %v1244 = vadd.f32 %v292, %v1243
  %v1245 = vpop.f32.mrf.mxu0
  %1246 = vmatprep.mubr.f32.mxu0 0.0
  %1247 = vmatmul.mubr.f32.gmra.mxu0 %v365
  %v1248 = vpop.f32.mrf.mxu0
  %v1249 = vadd.f32 %v292, %v1248
  %v1250 = vpop.f32.mrf.mxu0
  %1251 = vmatprep.mubr.f32.mxu0 0.0
  %1252 = vmatmul.mubr.f32.gmra.mxu0 %v368
  %v1253 = vpop.f32.mrf.mxu0
  %v1254 = vadd.f32 %v292, %v1253
  %v1255 = vpop.f32.mrf.mxu0
  %1256 = vmatprep.mubr.f32.mxu0 0.0
  %1257 = vmatmul.mubr.f32.gmra.mxu0 %v371
  %v1258 = vpop.f32.mrf.mxu0
  %v1259 = vadd.f32 %v292, %v1258
  %v1260 = vpop.f32.mrf.mxu0
  %1261 = vmatprep.mubr.f32.mxu0 0.0
  %1262 = vmatmul.mubr.f32.gmra.mxu0 %v374
  %v1263 = vpop.f32.mrf.mxu0
  %v1264 = vadd.f32 %v292, %v1263
  %v1265 = vpop.f32.mrf.mxu0
  %1266 = vmatprep.mubr.f32.mxu0 0.0
  %1267 = vmatmul.mubr.f32.gmra.mxu0 %v377
  %v1268 = vpop.f32.mrf.mxu0
  %v1269 = vadd.f32 %v292, %v1268
  %v1270 = vpop.f32.mrf.mxu0
  %1271 = vmatprep.mubr.f32.mxu0 0.0
  %1272 = vmatmul.mubr.f32.gmra.mxu0 %v380
  %v1273 = vpop.f32.mrf.mxu0
  %v1274 = vadd.f32 %v292, %v1273
  %v1275 = vpop.f32.mrf.mxu0
  %1276 = vmatprep.mubr.f32.mxu0 0.0
  %1277 = vmatmul.mubr.f32.gmra.mxu0 %v383
  %v1278 = vpop.f32.mrf.mxu0
  %v1279 = vadd.f32 %v292, %v1278
  %v1280 = vpop.f32.mrf.mxu0
  %1281 = vmatprep.mubr.f32.mxu0 0.0
  %1282 = vmatmul.mubr.f32.gmra.mxu0 %v386
  %v1283 = vpop.f32.mrf.mxu0
  %v1284 = vadd.f32 %v292, %v1283
  %v1285 = vpop.f32.mrf.mxu0
  %1286 = vmatprep.mubr.f32.mxu0 0.0
  %1287 = vmatmul.mubr.f32.gmra.mxu0 %v389
  %v1288 = vpop.f32.mrf.mxu0
  %v1289 = vadd.f32 %v292, %v1288
  %v1290 = vpop.f32.mrf.mxu0
  %1291 = vmatprep.mubr.f32.mxu0 0.0
  %1292 = vmatmul.mubr.f32.gmra.mxu0 %v392
  %v1293 = vpop.f32.mrf.mxu0
  %v1294 = vadd.f32 %v292, %v1293
  %v1295 = vpop.f32.mrf.mxu0
  %1296 = vmatprep.mubr.f32.mxu0 0.0
  %1297 = vmatmul.mubr.f32.gmra.mxu0 %v395
  %v1298 = vpop.f32.mrf.mxu0
  %v1299 = vadd.f32 %v292, %v1298
  %v1300 = vpop.f32.mrf.mxu0
  %1301 = vmatprep.mubr.f32.mxu0 0.0
  %1302 = vmatmul.mubr.f32.gmra.mxu0 %v398
  %v1303 = vpop.f32.mrf.mxu0
  %v1304 = vadd.f32 %v292, %v1303
  %v1305 = vpop.f32.mrf.mxu0
  %1306 = vmatprep.mubr.f32.mxu0 0.0
  %1307 = vmatmul.mubr.f32.gmra.mxu0 %v401
  %v1308 = vpop.f32.mrf.mxu0
  %v1309 = vadd.f32 %v292, %v1308
  %v1310 = vpop.f32.mrf.mxu0
  %1311 = vmatprep.mubr.f32.mxu0 0.0
  %1312 = vmatmul.mubr.f32.gmra.mxu0 %v404
  %v1313 = vpop.f32.mrf.mxu0
  %v1314 = vadd.f32 %v292, %v1313
  %v1315 = vpop.f32.mrf.mxu0
  %1316 = vmatprep.mubr.f32.mxu0 0.0
  %1317 = vmatmul.mubr.f32.gmra.mxu0 %v407
  %v1318 = vpop.f32.mrf.mxu0
  %v1319 = vadd.f32 %v292, %v1318
  %v1320 = vpop.f32.mrf.mxu0
  %1321 = vmatprep.mubr.f32.mxu0 0.0
  %1322 = vmatmul.mubr.f32.gmra.mxu0 %v410
  %v1323 = vpop.f32.mrf.mxu0
  %v1324 = vadd.f32 %v292, %v1323
  %v1325 = vpop.f32.mrf.mxu0
  %1326 = vmatprep.mubr.f32.mxu0 0.0
  %1327 = vmatmul.mubr.f32.gmra.mxu0 %v413
  %v1328 = vpop.f32.mrf.mxu0
  %v1329 = vadd.f32 %v292, %v1328
  %v1330 = vpop.f32.mrf.mxu0
  %1331 = vmatprep.mubr.f32.mxu0 0.0
  %1332 = vmatmul.mubr.f32.gmra.mxu0 %v416
  %v1333 = vpop.f32.mrf.mxu0
  %v1334 = vadd.f32 %v292, %v1333
  %v1335 = vpop.f32.mrf.mxu0
  %1336 = vmatprep.mubr.f32.mxu0 0.0
  %1337 = vmatmul.mubr.f32.gmra.mxu0 %v419
  %v1338 = vpop.f32.mrf.mxu0
  %v1339 = vadd.f32 %v292, %v1338
  %v1340 = vpop.f32.mrf.mxu0
  %1341 = vmatprep.mubr.f32.mxu0 0.0
  %1342 = vmatmul.mubr.f32.gmra.mxu0 %v422
  %v1343 = vpop.f32.mrf.mxu0
  %v1344 = vadd.f32 %v292, %v1343
  %v1345 = vpop.f32.mrf.mxu0
  %1346 = vmatprep.mubr.f32.mxu0 0.0
  %1347 = vmatmul.mubr.f32.gmra.mxu0 %v425
  %v1348 = vpop.f32.mrf.mxu0
  %v1349 = vadd.f32 %v292, %v1348
  %v1350 = vpop.f32.mrf.mxu0
  %1351 = vmatprep.mubr.f32.mxu0 0.0
  %1352 = vmatmul.mubr.f32.gmra.mxu0 %v428
  %v1353 = vpop.f32.mrf.mxu0
  %v1354 = vadd.f32 %v292, %v1353
  %v1355 = vpop.f32.mrf.mxu0
  %1356 = vmatprep.mubr.f32.mxu0 0.0
  %1357 = vmatmul.mubr.f32.gmra.mxu0 %v431
  %v1358 = vpop.f32.mrf.mxu0
  %v1359 = vadd.f32 %v292, %v1358
  %v1360 = vpop.f32.mrf.mxu0
  %1361 = vmatprep.mubr.f32.mxu0 0.0
  %1362 = vmatmul.mubr.f32.gmra.mxu0 %v434
  %v1363 = vpop.f32.mrf.mxu0
  %v1364 = vadd.f32 %v292, %v1363
  %v1365 = vpop.f32.mrf.mxu0
  %1366 = vmatprep.mubr.f32.mxu0 0.0
  %1367 = vmatmul.mubr.f32.gmra.mxu0 %v437
  %v1368 = vpop.f32.mrf.mxu0
  %v1369 = vadd.f32 %v292, %v1368
  %v1370 = vpop.f32.mrf.mxu0
  %1371 = vmatprep.mubr.f32.mxu0 0.0
  %1372 = vmatmul.mubr.f32.gmra.mxu0 %v440
  %v1373 = vpop.f32.mrf.mxu0
  %v1374 = vadd.f32 %v292, %v1373
  %v1375 = vpop.f32.mrf.mxu0
  %1376 = vmatprep.mubr.f32.mxu0 0.0
  %1377 = vmatmul.mubr.f32.gmra.mxu0 %v443
  %v1378 = vpop.f32.mrf.mxu0
  %v1379 = vadd.f32 %v292, %v1378
  %v1380 = vpop.f32.mrf.mxu0
  %1381 = vmatprep.mubr.f32.mxu0 0.0
  %1382 = vmatmul.mubr.f32.gmra.mxu0 %v446
  %v1383 = vpop.f32.mrf.mxu0
  %v1384 = vadd.f32 %v292, %v1383
  %v1385 = vpop.f32.mrf.mxu0
  %1386 = vmatprep.mubr.f32.mxu0 0.0
  %1387 = vmatmul.mubr.f32.gmra.mxu0 %v449
  %v1388 = vpop.f32.mrf.mxu0
  %v1389 = vadd.f32 %v292, %v1388
  %v1390 = vpop.f32.mrf.mxu0
  %1391 = vmatprep.mubr.f32.mxu0 0.0
  %1392 = vmatmul.mubr.f32.gmra.mxu0 %v452
  %v1393 = vpop.f32.mrf.mxu0
  %v1394 = vadd.f32 %v292, %v1393
  %v1395 = vpop.f32.mrf.mxu0
  %1396 = vmatprep.mubr.f32.mxu0 0.0
  %1397 = vmatmul.mubr.f32.gmra.mxu0 %v455
  %v1398 = vpop.f32.mrf.mxu0
  %v1399 = vadd.f32 %v292, %v1398
  %v1400 = vpop.f32.mrf.mxu0
  %1401 = vmatprep.mubr.f32.mxu0 0.0
  %1402 = vmatmul.mubr.f32.gmra.mxu0 %v458
  %v1403 = vpop.f32.mrf.mxu0
  %v1404 = vadd.f32 %v292, %v1403
  %v1405 = vpop.f32.mrf.mxu0
  %1406 = vmatprep.mubr.f32.mxu0 0.0
  %1407 = vmatmul.mubr.f32.gmra.mxu0 %v461
  %v1408 = vpop.f32.mrf.mxu0
  %v1409 = vadd.f32 %v292, %v1408
  %v1410 = vpop.f32.mrf.mxu0
  %1411 = vmatprep.mubr.f32.mxu0 0.0
  %1412 = vmatmul.mubr.f32.gmra.mxu0 %v464
  %v1413 = vpop.f32.mrf.mxu0
  %v1414 = vadd.f32 %v292, %v1413
  %v1415 = vpop.f32.mrf.mxu0
  %1416 = vmatprep.mubr.f32.mxu0 0.0
  %1417 = vmatmul.mubr.f32.gmra.mxu0 %v467
  %v1418 = vpop.f32.mrf.mxu0
  %v1419 = vadd.f32 %v292, %v1418
  %v1420 = vpop.f32.mrf.mxu0
  %1421 = vmatprep.mubr.f32.mxu0 0.0
  %1422 = vmatmul.mubr.f32.gmra.mxu0 %v470
  %v1423 = vpop.f32.mrf.mxu0
  %v1424 = vadd.f32 %v292, %v1423
  %v1425 = vpop.f32.mrf.mxu0
  %1426 = vmatprep.mubr.f32.mxu0 0.0
  %1427 = vmatmul.mubr.f32.gmra.mxu0 %v473
  %v1428 = vpop.f32.mrf.mxu0
  %v1429 = vadd.f32 %v292, %v1428
  %v1430 = vpop.f32.mrf.mxu0
  %1431 = vmatprep.mubr.f32.mxu0 0.0
  %1432 = vmatmul.mubr.f32.gmra.mxu0 %v476
  %v1433 = vpop.f32.mrf.mxu0
  %v1434 = vadd.f32 %v292, %v1433
  %v1435 = vpop.f32.mrf.mxu0
  %1436 = vmatprep.mubr.f32.mxu0 0.0
  %1437 = vmatmul.mubr.f32.gmra.mxu0 %v479
  %v1438 = vpop.f32.mrf.mxu0
  %v1439 = vadd.f32 %v292, %v1438
  %v1440 = vpop.f32.mrf.mxu0
  %1441 = vmatprep.mubr.f32.mxu0 0.0
  %1442 = vmatmul.mubr.f32.gmra.mxu0 %v482
  %v1443 = vpop.f32.mrf.mxu0
  %v1444 = vadd.f32 %v292, %v1443
  %v1445 = vpop.f32.mrf.mxu0
  %1446 = vmatprep.mubr.f32.mxu0 0.0
  %1447 = vmatmul.mubr.f32.gmra.mxu0 %v485
  %v1448 = vpop.f32.mrf.mxu0
  %v1449 = vadd.f32 %v292, %v1448
  %v1450 = vpop.f32.mrf.mxu0
  %1451 = vmatprep.mubr.f32.mxu0 0.0
  %1452 = vmatmul.mubr.f32.gmra.mxu0 %v488
  %v1453 = vpop.f32.mrf.mxu0
  %v1454 = vadd.f32 %v292, %v1453
  %v1455 = vpop.f32.mrf.mxu0
  %1456 = vmatprep.mubr.f32.mxu0 0.0
  %1457 = vmatmul.mubr.f32.gmra.mxu0 %v491
  %v1458 = vpop.f32.mrf.mxu0
  %v1459 = vadd.f32 %v292, %v1458
  %v1460 = vpop.f32.mrf.mxu0
  %1461 = vmatprep.mubr.f32.mxu0 0.0
  %1462 = vmatmul.mubr.f32.gmra.mxu0 %v494
  %v1463 = vpop.f32.mrf.mxu0
  %v1464 = vadd.f32 %v292, %v1463
  %v1465 = vpop.f32.mrf.mxu0
  %1466 = vmatprep.mubr.f32.mxu0 0.0
  %1467 = vmatmul.mubr.f32.gmra.mxu0 %v497
  %v1468 = vpop.f32.mrf.mxu0
  %v1469 = vadd.f32 %v292, %v1468
  %v1470 = vpop.f32.mrf.mxu0
  %1471 = vmatprep.mubr.f32.mxu0 0.0
  %1472 = vmatmul.mubr.f32.gmra.mxu0 %v500
  %v1473 = vpop.f32.mrf.mxu0
  %v1474 = vadd.f32 %v292, %v1473
  %v1475 = vpop.f32.mrf.mxu0
  %1476 = vmatprep.mubr.f32.mxu0 0.0
  %1477 = vmatmul.mubr.f32.gmra.mxu0 %v503
  %v1478 = vpop.f32.mrf.mxu0
  %v1479 = vadd.f32 %v292, %v1478
  %v1480 = vpop.f32.mrf.mxu0
  %1481 = vmatprep.mubr.f32.mxu0 0.0
  %1482 = vmatmul.mubr.f32.gmra.mxu0 %v506
  %v1483 = vpop.f32.mrf.mxu0
  %v1484 = vadd.f32 %v292, %v1483
  %v1485 = vpop.f32.mrf.mxu0
  %1486 = vmatprep.mubr.f32.mxu0 0.0
  %1487 = vmatmul.mubr.f32.gmra.mxu0 %v509
  %v1488 = vpop.f32.mrf.mxu0
  %v1489 = vadd.f32 %v292, %v1488
  %v1490 = vpop.f32.mrf.mxu0
  %1491 = vmatprep.mubr.f32.mxu0 0.0
  %1492 = vmatmul.mubr.f32.gmra.mxu0 %v512
  %v1493 = vpop.f32.mrf.mxu0
  %v1494 = vadd.f32 %v292, %v1493
  %v1495 = vpop.f32.mrf.mxu0
  %1496 = vmatprep.mubr.f32.mxu0 0.0
  %1497 = vmatmul.mubr.f32.gmra.mxu0 %v515
  %v1498 = vpop.f32.mrf.mxu0
  %v1499 = vadd.f32 %v292, %v1498
  %v1500 = vpop.f32.mrf.mxu0
  %1501 = vmatprep.mubr.f32.mxu0 0.0
  %1502 = vmatmul.mubr.f32.gmra.mxu0 %v518
  %v1503 = vpop.f32.mrf.mxu0
  %v1504 = vadd.f32 %v292, %v1503
  %v1505 = vpop.f32.mrf.mxu0
  %1506 = vmatprep.mubr.f32.mxu0 0.0
  %1507 = vmatmul.mubr.f32.gmra.mxu0 %v521
  %v1508 = vpop.f32.mrf.mxu0
  %v1509 = vadd.f32 %v292, %v1508
  %v1510 = vpop.f32.mrf.mxu0
  %1511 = vmatprep.mubr.f32.mxu0 0.0
  %1512 = vmatmul.mubr.f32.gmra.mxu0 %v524
  %v1513 = vpop.f32.mrf.mxu0
  %v1514 = vadd.f32 %v292, %v1513
  %v1515 = vpop.f32.mrf.mxu0
  %1516 = vmatprep.mubr.f32.mxu0 0.0
  %1517 = vmatmul.mubr.f32.gmra.mxu0 %v527
  %v1518 = vpop.f32.mrf.mxu0
  %v1519 = vadd.f32 %v292, %v1518
  %v1520 = vpop.f32.mrf.mxu0
  %1521 = vmatprep.mubr.f32.mxu0 0.0
  %1522 = vmatmul.mubr.f32.gmra.mxu0 %v530
  %v1523 = vpop.f32.mrf.mxu0
  %v1524 = vadd.f32 %v292, %v1523
  %v1525 = vpop.f32.mrf.mxu0
  %1526 = vmatprep.mubr.f32.mxu0 0.0
  %1527 = vmatmul.mubr.f32.gmra.mxu0 %v533
  %v1528 = vpop.f32.mrf.mxu0
  %v1529 = vadd.f32 %v292, %v1528
  %v1530 = vpop.f32.mrf.mxu0
  %1531 = vmatprep.mubr.f32.mxu0 0.0
  %1532 = vmatmul.mubr.f32.gmra.mxu0 %v536
  %v1533 = vpop.f32.mrf.mxu0
  %v1534 = vadd.f32 %v292, %v1533
  %v1535 = vpop.f32.mrf.mxu0
  %1536 = vmatprep.mubr.f32.mxu0 0.0
  %1537 = vmatmul.mubr.f32.gmra.mxu0 %v539
  %v1538 = vpop.f32.mrf.mxu0
  %v1539 = vadd.f32 %v292, %v1538
  %v1540 = vpop.f32.mrf.mxu0
  %1541 = vmatprep.mubr.f32.mxu0 0.0
  %1542 = vmatmul.mubr.f32.gmra.mxu0 %v542
  %v1543 = vpop.f32.mrf.mxu0
  %v1544 = vadd.f32 %v292, %v1543
  %v1545 = vpop.f32.mrf.mxu0
  %1546 = vmatprep.mubr.f32.mxu0 0.0
  %1547 = vmatmul.mubr.f32.gmra.mxu0 %v545
  %v1548 = vpop.f32.mrf.mxu0
  %v1549 = vadd.f32 %v292, %v1548
  %v1550 = vpop.f32.mrf.mxu0
  %1551 = vmatprep.mubr.f32.mxu0 0.0
  %1552 = vmatmul.mubr.f32.gmra.mxu0 %v548
  %v1553 = vpop.f32.mrf.mxu0
  %v1554 = vadd.f32 %v292, %v1553
  %v1555 = vpop.f32.mrf.mxu0
  %1556 = vmatprep.mubr.f32.mxu0 0.0
  %1557 = vmatmul.mubr.f32.gmra.mxu0 %v551
  %v1558 = vpop.f32.mrf.mxu0
  %v1559 = vadd.f32 %v292, %v1558
  %v1560 = vpop.f32.mrf.mxu0
  %1561 = vmatprep.mubr.f32.mxu0 0.0
  %1562 = vmatmul.mubr.f32.gmra.mxu0 %v554
  %v1563 = vpop.f32.mrf.mxu0
  %v1564 = vadd.f32 %v292, %v1563
  %v1565 = vpop.f32.mrf.mxu0
  %1566 = vmatprep.mubr.f32.mxu0 0.0
  %1567 = vmatmul.mubr.f32.gmra.mxu0 %v557
  %v1568 = vpop.f32.mrf.mxu0
  %v1569 = vadd.f32 %v292, %v1568
  %v1570 = vpop.f32.mrf.mxu0
  %1571 = vmatprep.mubr.f32.mxu0 0.0
  %1572 = vmatmul.mubr.f32.gmra.mxu0 %v560
  %v1573 = vpop.f32.mrf.mxu0
  %v1574 = vadd.f32 %v292, %v1573
  %v1575 = vpop.f32.mrf.mxu0
  %1576 = vmatprep.mubr.f32.mxu0 0.0
  %1577 = vmatmul.mubr.f32.gmra.mxu0 %v563
  %v1578 = vpop.f32.mrf.mxu0
  %v1579 = vadd.f32 %v292, %v1578
  %v1580 = vpop.f32.mrf.mxu0
  %1581 = vmatprep.mubr.f32.mxu0 0.0
  %1582 = vmatmul.mubr.f32.gmra.mxu0 %v566
  %v1583 = vpop.f32.mrf.mxu0
  %v1584 = vadd.f32 %v292, %v1583
  %v1585 = vpop.f32.mrf.mxu0
  %1586 = vmatprep.mubr.f32.mxu0 0.0
  %1587 = vmatmul.mubr.f32.gmra.mxu0 %v569
  %v1588 = vpop.f32.mrf.mxu0
  %v1589 = vadd.f32 %v292, %v1588
  %v1590 = vpop.f32.mrf.mxu0
  %1591 = vmatprep.mubr.f32.mxu0 0.0
  %1592 = vmatmul.mubr.f32.gmra.mxu0 %v572
  %v1593 = vpop.f32.mrf.mxu0
  %v1594 = vadd.f32 %v292, %v1593
  %v1595 = vpop.f32.mrf.mxu0
  %1596 = vmatprep.mubr.f32.mxu0 0.0
  %1597 = vmatmul.mubr.f32.gmra.mxu0 %v575
  %v1598 = vpop.f32.mrf.mxu0
  %v1599 = vadd.f32 %v292, %v1598
  %v1600 = vpop.f32.mrf.mxu0
  %1601 = vmatprep.mubr.f32.mxu0 0.0
  %1602 = vmatmul.mubr.f32.gmra.mxu0 %v578
  %v1603 = vpop.f32.mrf.mxu0
  %v1604 = vadd.f32 %v292, %v1603
  %v1605 = vpop.f32.mrf.mxu0
  %1606 = vmatprep.mubr.f32.mxu0 0.0
  %1607 = vmatmul.mubr.f32.gmra.mxu0 %v581
  %v1608 = vpop.f32.mrf.mxu0
  %v1609 = vadd.f32 %v292, %v1608
  %v1610 = vpop.f32.mrf.mxu0
  %1611 = vmatprep.mubr.f32.mxu0 0.0
  %1612 = vmatmul.mubr.f32.gmra.mxu0 %v584
  %v1613 = vpop.f32.mrf.mxu0
  %v1614 = vadd.f32 %v292, %v1613
  %v1615 = vpop.f32.mrf.mxu0
  %1616 = vmatprep.mubr.f32.mxu0 0.0
  %1617 = vmatmul.mubr.f32.gmra.mxu0 %v587
  %v1618 = vpop.f32.mrf.mxu0
  %v1619 = vadd.f32 %v292, %v1618
  %v1620 = vpop.f32.mrf.mxu0
  %1621 = vmatprep.mubr.f32.mxu0 0.0
  %1622 = vmatmul.mubr.f32.gmra.mxu0 %v590
  %v1623 = vpop.f32.mrf.mxu0
  %v1624 = vadd.f32 %v292, %v1623
  %v1625 = vpop.f32.mrf.mxu0
  %1626 = vmatprep.mubr.f32.mxu0 0.0
  %1627 = vmatmul.mubr.f32.gmra.mxu0 %v593
  %v1628 = vpop.f32.mrf.mxu0
  %v1629 = vadd.f32 %v292, %v1628
  %v1630 = vpop.f32.mrf.mxu0
  %1631 = vmatprep.mubr.f32.mxu0 0.0
  %1632 = vmatmul.mubr.f32.gmra.mxu0 %v596
  %v1633 = vpop.f32.mrf.mxu0
  %v1634 = vadd.f32 %v292, %v1633
  %v1635 = vpop.f32.mrf.mxu0
  %1636 = vmatprep.mubr.f32.mxu0 0.0
  %1637 = vmatmul.mubr.f32.gmra.mxu0 %v599
  %v1638 = vpop.f32.mrf.mxu0
  %v1639 = vadd.f32 %v292, %v1638
  %v1640 = vpop.f32.mrf.mxu0
  %1641 = vmatprep.mubr.f32.mxu0 0.0
  %1642 = vmatmul.mubr.f32.gmra.mxu0 %v602
  %v1643 = vpop.f32.mrf.mxu0
  %v1644 = vadd.f32 %v292, %v1643
  %v1645 = vpop.f32.mrf.mxu0
  %1646 = vmatprep.mubr.f32.mxu0 0.0
  %1647 = vmatmul.mubr.f32.gmra.mxu0 %v605
  %v1648 = vpop.f32.mrf.mxu0
  %v1649 = vadd.f32 %v292, %v1648
  %v1650 = vpop.f32.mrf.mxu0
  %1651 = vmatprep.mubr.f32.mxu0 0.0
  %1652 = vmatmul.mubr.f32.gmra.mxu0 %v608
  %v1653 = vpop.f32.mrf.mxu0
  %v1654 = vadd.f32 %v292, %v1653
  %v1655 = vpop.f32.mrf.mxu0
  %1656 = vmatprep.mubr.f32.mxu0 0.0
  %1657 = vmatmul.mubr.f32.gmra.mxu0 %v611
  %v1658 = vpop.f32.mrf.mxu0
  %v1659 = vadd.f32 %v292, %v1658
  %v1660 = vpop.f32.mrf.mxu0
  %1661 = vmatprep.mubr.f32.mxu0 0.0
  %1662 = vmatmul.mubr.f32.gmra.mxu0 %v614
  %v1663 = vpop.f32.mrf.mxu0
  %v1664 = vadd.f32 %v292, %v1663
  %v1665 = vpop.f32.mrf.mxu0
  %1666 = vmatprep.mubr.f32.mxu0 0.0
  %1667 = vmatmul.mubr.f32.gmra.mxu0 %v617
  %v1668 = vpop.f32.mrf.mxu0
  %v1669 = vadd.f32 %v292, %v1668
  %v1670 = vpop.f32.mrf.mxu0
  %1671 = vmatprep.mubr.f32.mxu0 0.0
  %1672 = vmatmul.mubr.f32.gmra.mxu0 %v620
  %v1673 = vpop.f32.mrf.mxu0
  %v1674 = vadd.f32 %v292, %v1673
  %v1675 = vpop.f32.mrf.mxu0
  %1676 = vmatprep.mubr.f32.mxu0 0.0
  %1677 = vmatmul.mubr.f32.gmra.mxu0 %v623
  %v1678 = vpop.f32.mrf.mxu0
  %v1679 = vadd.f32 %v292, %v1678
  %v1680 = vpop.f32.mrf.mxu0
  %1681 = vmatprep.mubr.f32.mxu0 0.0
  %1682 = vmatmul.mubr.f32.gmra.mxu0 %v626
  %v1683 = vpop.f32.mrf.mxu0
  %v1684 = vadd.f32 %v292, %v1683
  %v1685 = vpop.f32.mrf.mxu0
  %1686 = vmatprep.mubr.f32.mxu0 0.0
  %1687 = vmatmul.mubr.f32.gmra.mxu0 %v629
  %v1688 = vpop.f32.mrf.mxu0
  %v1689 = vadd.f32 %v292, %v1688
  %v1690 = vpop.f32.mrf.mxu0
  %1691 = vmatprep.mubr.f32.mxu0 0.0
  %1692 = vmatmul.mubr.f32.gmra.mxu0 %v632
  %v1693 = vpop.f32.mrf.mxu0
  %v1694 = vadd.f32 %v292, %v1693
  %v1695 = vpop.f32.mrf.mxu0
  %1696 = vmatprep.mubr.f32.mxu0 0.0
  %1697 = vmatmul.mubr.f32.gmra.mxu0 %v635
  %v1698 = vpop.f32.mrf.mxu0
  %v1699 = vadd.f32 %v292, %v1698
  %v1700 = vpop.f32.mrf.mxu0
  %1701 = vmatprep.mubr.f32.mxu0 0.0
  %1702 = vmatmul.mubr.f32.gmra.mxu0 %v638
  %v1703 = vpop.f32.mrf.mxu0
  %v1704 = vadd.f32 %v292, %v1703
  %v1705 = vpop.f32.mrf.mxu0
  %1706 = vmatprep.mubr.f32.mxu0 0.0
  %1707 = vmatmul.mubr.f32.gmra.mxu0 %v641
  %v1708 = vpop.f32.mrf.mxu0
  %v1709 = vadd.f32 %v292, %v1708
  %v1710 = vpop.f32.mrf.mxu0
  %1711 = vmatprep.mubr.f32.mxu0 0.0
  %1712 = vmatmul.mubr.f32.gmra.mxu0 %v644
  %v1713 = vpop.f32.mrf.mxu0
  %v1714 = vadd.f32 %v292, %v1713
  %v1715 = vpop.f32.mrf.mxu0
  %1716 = vmatprep.mubr.f32.mxu0 0.0
  %1717 = vmatmul.mubr.f32.gmra.mxu0 %v647
  %v1718 = vpop.f32.mrf.mxu0
  %v1719 = vadd.f32 %v292, %v1718
  %v1720 = vpop.f32.mrf.mxu0
  %1721 = vmatprep.mubr.f32.mxu0 0.0
  %1722 = vmatmul.mubr.f32.gmra.mxu0 %v650
  %v1723 = vpop.f32.mrf.mxu0
  %v1724 = vadd.f32 %v292, %v1723
  %v1725 = vpop.f32.mrf.mxu0
  %1726 = vmatprep.mubr.f32.mxu0 0.0
  %1727 = vmatmul.mubr.f32.gmra.mxu0 %v653
  %v1728 = vpop.f32.mrf.mxu0
  %v1729 = vadd.f32 %v292, %v1728
  %v1730 = vpop.f32.mrf.mxu0
  %1731 = vmatprep.mubr.f32.mxu0 0.0
  %1732 = vmatmul.mubr.f32.gmra.mxu0 %v656
  %v1733 = vpop.f32.mrf.mxu0
  %v1734 = vadd.f32 %v292, %v1733
  %v1735 = vpop.f32.mrf.mxu0
  %1736 = vmatprep.mubr.f32.mxu0 0.0
  %1737 = vmatmul.mubr.f32.gmra.mxu0 %v659
  %v1738 = vpop.f32.mrf.mxu0
  %v1739 = vadd.f32 %v292, %v1738
  %v1740 = vpop.f32.mrf.mxu0
  %1741 = vmatprep.mubr.f32.mxu0 0.0
  %1742 = vmatmul.mubr.f32.gmra.mxu0 %v662
  %v1743 = vpop.f32.mrf.mxu0
  %v1744 = vadd.f32 %v292, %v1743
  %v1745 = vpop.f32.mrf.mxu0
  %1746 = vmatprep.mubr.f32.mxu0 0.0
  %1747 = vmatmul.mubr.f32.gmra.mxu0 %v665
  %v1748 = vpop.f32.mrf.mxu0
  %v1749 = vadd.f32 %v292, %v1748
  %v1750 = vpop.f32.mrf.mxu0
  %1751 = vmatprep.mubr.f32.mxu0 0.0
  %1752 = vmatmul.mubr.f32.gmra.mxu0 %v668
  %v1753 = vpop.f32.mrf.mxu0
  %v1754 = vadd.f32 %v292, %v1753
  %v1755 = vpop.f32.mrf.mxu0
  %1756 = vmatprep.mubr.f32.mxu0 0.0
  %1757 = vmatmul.mubr.f32.gmra.mxu0 %v671
  %v1758 = vpop.f32.mrf.mxu0
  %v1759 = vadd.f32 %v292, %v1758
  %v1760 = vpop.f32.mrf.mxu0
  %1761 = vmatprep.mubr.f32.mxu0 0.0
  %1762 = vmatmul.mubr.f32.gmra.mxu0 %v674
  %v1763 = vpop.f32.mrf.mxu0
  %v1764 = vadd.f32 %v292, %v1763
  %v1765 = vpop.f32.mrf.mxu0
  %1766 = vmatprep.mubr.f32.mxu0 0.0
  %1767 = vmatmul.mubr.f32.gmra.mxu0 %v677
  %v1768 = vpop.f32.mrf.mxu0
  %v1769 = vadd.f32 %v292, %v1768
  %v1770 = vpop.f32.mrf.mxu0
  %1771 = vmatprep.mubr.f32.mxu0 0.0
  %1772 = vmatmul.mubr.f32.gmra.mxu0 %v680
  %v1773 = vpop.f32.mrf.mxu0
  %v1774 = vadd.f32 %v292, %v1773
  %v1775 = vpop.f32.mrf.mxu0
  %1776 = vmatprep.mubr.f32.mxu0 0.0
  %1777 = vmatmul.mubr.f32.gmra.mxu0 %v683
  %v1778 = vpop.f32.mrf.mxu0
  %v1779 = vadd.f32 %v292, %v1778
  %v1780 = vpop.f32.mrf.mxu0
  %1781 = vmatprep.mubr.f32.mxu0 0.0
  %1782 = vmatmul.mubr.f32.gmra.mxu0 %v686
  %v1783 = vpop.f32.mrf.mxu0
  %v1784 = vadd.f32 %v292, %v1783
  %v1785 = vpop.f32.mrf.mxu0
  %1786 = vmatprep.mubr.f32.mxu0 0.0
  %1787 = vmatmul.mubr.f32.gmra.mxu0 %v689
  %v1788 = vpop.f32.mrf.mxu0
  %v1789 = vadd.f32 %v292, %v1788
  %v1790 = vpop.f32.mrf.mxu0
  %1791 = vmatprep.mubr.f32.mxu0 0.0
  %1792 = vmatmul.mubr.f32.gmra.mxu0 %v692
  %v1793 = vpop.f32.mrf.mxu0
  %v1794 = vadd.f32 %v292, %v1793
  %v1795 = vpop.f32.mrf.mxu0
  %1796 = vmatprep.mubr.f32.mxu0 0.0
  %1797 = vmatmul.mubr.f32.gmra.mxu0 %v695
  %v1798 = vpop.f32.mrf.mxu0
  %v1799 = vadd.f32 %v292, %v1798
  %v1800 = vpop.f32.mrf.mxu0
  %1801 = vmatprep.mubr.f32.mxu0 0.0
  %1802 = vmatmul.mubr.f32.gmra.mxu0 %v698
  %v1803 = vpop.f32.mrf.mxu0
  %v1804 = vadd.f32 %v292, %v1803
  %v1805 = vpop.f32.mrf.mxu0
  %1806 = vmatprep.mubr.f32.mxu0 0.0
  %1807 = vmatmul.mubr.f32.gmra.mxu0 %v701
  %v1808 = vpop.f32.mrf.mxu0
  %v1809 = vadd.f32 %v292, %v1808
  %v1810 = vpop.f32.mrf.mxu0
  %1811 = vmatprep.mubr.f32.mxu0 0.0
  %1812 = vmatmul.mubr.f32.gmra.mxu0 %v704
  %v1813 = vpop.f32.mrf.mxu0
  %v1814 = vadd.f32 %v292, %v1813
  %v1815 = vpop.f32.mrf.mxu0
  %1816 = vmatprep.mubr.f32.mxu0 0.0
  %1817 = vmatmul.mubr.f32.gmra.mxu0 %v707
  %v1818 = vpop.f32.mrf.mxu0
  %v1819 = vadd.f32 %v292, %v1818
  %v1820 = vpop.f32.mrf.mxu0
  %1821 = vmatprep.mubr.f32.mxu0 0.0
  %1822 = vmatmul.mubr.f32.gmra.mxu0 %v710
  %v1823 = vpop.f32.mrf.mxu0
  %v1824 = vadd.f32 %v292, %v1823
  %v1825 = vpop.f32.mrf.mxu0
  %1826 = vmatprep.mubr.f32.mxu0 0.0
  %1827 = vmatmul.mubr.f32.gmra.mxu0 %v713
  %v1828 = vpop.f32.mrf.mxu0
  %v1829 = vadd.f32 %v292, %v1828
  %v1830 = vpop.f32.mrf.mxu0
  %1831 = vmatprep.mubr.f32.mxu0 0.0
  %1832 = vmatmul.mubr.f32.gmra.mxu0 %v716
  %v1833 = vpop.f32.mrf.mxu0
  %v1834 = vadd.f32 %v292, %v1833
  %v1835 = vpop.f32.mrf.mxu0
  %1836 = vmatprep.mubr.f32.mxu0 0.0
  %1837 = vmatmul.mubr.f32.gmra.mxu0 %v719
  %v1838 = vpop.f32.mrf.mxu0
  %v1839 = vadd.f32 %v292, %v1838
  %v1840 = vpop.f32.mrf.mxu0
  %1841 = vmatprep.mubr.f32.mxu0 0.0
  %1842 = vmatmul.mubr.f32.gmra.mxu0 %v722
  %v1843 = vpop.f32.mrf.mxu0
  %v1844 = vadd.f32 %v292, %v1843
  %v1845 = vpop.f32.mrf.mxu0
  %1846 = vmatprep.mubr.f32.mxu0 0.0
  %1847 = vmatmul.mubr.f32.gmra.mxu0 %v725
  %v1848 = vpop.f32.mrf.mxu0
  %v1849 = vadd.f32 %v292, %v1848
  %v1850 = vpop.f32.mrf.mxu0
  %1851 = vmatprep.mubr.f32.mxu0 0.0
  %1852 = vmatmul.mubr.f32.gmra.mxu0 %v728
  %v1853 = vpop.f32.mrf.mxu0
  %v1854 = vadd.f32 %v292, %v1853
  %v1855 = vpop.f32.mrf.mxu0
  %1856 = vmatprep.mubr.f32.mxu0 0.0
  %1857 = vmatmul.mubr.f32.gmra.mxu0 %v731
  %v1858 = vpop.f32.mrf.mxu0
  %v1859 = vadd.f32 %v292, %v1858
  %v1860 = vpop.f32.mrf.mxu0
  %1861 = vmatprep.mubr.f32.mxu0 0.0
  %1862 = vmatmul.mubr.f32.gmra.mxu0 %v734
  %v1863 = vpop.f32.mrf.mxu0
  %v1864 = vadd.f32 %v292, %v1863
  %v1865 = vpop.f32.mrf.mxu0
  %1866 = vmatprep.mubr.f32.mxu0 0.0
  %1867 = vmatmul.mubr.f32.gmra.mxu0 %v737
  %v1868 = vpop.f32.mrf.mxu0
  %v1869 = vadd.f32 %v292, %v1868
  %v1870 = vpop.f32.mrf.mxu0
  %1871 = vmatprep.mubr.f32.mxu0 0.0
  %1872 = vmatmul.mubr.f32.gmra.mxu0 %v740
  %v1873 = vpop.f32.mrf.mxu0
  %v1874 = vadd.f32 %v292, %v1873
  %v1875 = vpop.f32.mrf.mxu0
  %1876 = vmatprep.mubr.f32.mxu0 0.0
  %1877 = vmatmul.mubr.f32.gmra.mxu0 %v743
  %v1878 = vpop.f32.mrf.mxu0
  %v1879 = vadd.f32 %v292, %v1878
  %v1880 = vpop.f32.mrf.mxu0
  %1881 = vmatprep.mubr.f32.mxu0 0.0
  %1882 = vmatmul.mubr.f32.gmra.mxu0 %v746
  %v1883 = vpop.f32.mrf.mxu0
  %v1884 = vadd.f32 %v292, %v1883
  %v1885 = vpop.f32.mrf.mxu0
  %1886 = vmatprep.mubr.f32.mxu0 0.0
  %1887 = vmatmul.mubr.f32.gmra.mxu0 %v749
  %v1888 = vpop.f32.mrf.mxu0
  %v1889 = vadd.f32 %v292, %v1888
  %v1890 = vpop.f32.mrf.mxu0
  %1891 = vmatprep.mubr.f32.mxu0 0.0
  %1892 = vmatmul.mubr.f32.gmra.mxu0 %v752
  %v1893 = vpop.f32.mrf.mxu0
  %v1894 = vadd.f32 %v292, %v1893
  %v1895 = vpop.f32.mrf.mxu0
  %1896 = vmatprep.mubr.f32.mxu0 0.0
  %1897 = vmatmul.mubr.f32.gmra.mxu0 %v755
  %v1898 = vpop.f32.mrf.mxu0
  %v1899 = vadd.f32 %v292, %v1898
  %v1900 = vpop.f32.mrf.mxu0
  %1901 = vmatprep.mubr.f32.mxu0 0.0
  %1902 = vmatmul.mubr.f32.gmra.mxu0 %v758
  %v1903 = vpop.f32.mrf.mxu0
  %v1904 = vadd.f32 %v292, %v1903
  %v1905 = vpop.f32.mrf.mxu0
  %1906 = vmatprep.mubr.f32.mxu0 0.0
  %1907 = vmatmul.mubr.f32.gmra.mxu0 %v761
  %v1908 = vpop.f32.mrf.mxu0
  %v1909 = vadd.f32 %v292, %v1908
  %v1910 = vpop.f32.mrf.mxu0
  %1911 = vmatprep.mubr.f32.mxu0 0.0
  %1912 = vmatmul.mubr.f32.gmra.mxu0 %v764
  %v1913 = vpop.f32.mrf.mxu0
  %v1914 = vadd.f32 %v292, %v1913
  %v1915 = vpop.f32.mrf.mxu0
  %1916 = vmatprep.mubr.f32.mxu0 0.0
  %1917 = vmatmul.mubr.f32.gmra.mxu0 %v767
  %v1918 = vpop.f32.mrf.mxu0
  %v1919 = vadd.f32 %v292, %v1918
  %v1920 = vpop.f32.mrf.mxu0
  %1921 = vmatprep.mubr.f32.mxu0 0.0
  %1922 = vmatmul.mubr.f32.gmra.mxu0 %v770
  %v1923 = vpop.f32.mrf.mxu0
  %v1924 = vadd.f32 %v292, %v1923
  %v1925 = vpop.f32.mrf.mxu0
  %1926 = vmatprep.mubr.f32.mxu0 0.0
  %1927 = vmatmul.mubr.f32.gmra.mxu0 %v773
  %v1928 = vpop.f32.mrf.mxu0
  %v1929 = vadd.f32 %v292, %v1928
  %v1930 = vpop.f32.mrf.mxu0
  %1931 = vmatprep.mubr.f32.mxu0 0.0
  %1932 = vmatmul.mubr.f32.gmra.mxu0 %v776
  %v1933 = vpop.f32.mrf.mxu0
  %v1934 = vadd.f32 %v292, %v1933
  %v1935 = vpop.f32.mrf.mxu0
  %1936 = vmatprep.mubr.f32.mxu0 0.0
  %1937 = vmatmul.mubr.f32.gmra.mxu0 %v779
  %v1938 = vpop.f32.mrf.mxu0
  %v1939 = vadd.f32 %v292, %v1938
  %v1940 = vpop.f32.mrf.mxu0
  %1941 = vmatprep.mubr.f32.mxu0 0.0
  %1942 = vmatmul.mubr.f32.gmra.mxu0 %v782
  %v1943 = vpop.f32.mrf.mxu0
  %v1944 = vadd.f32 %v292, %v1943
  %v1945 = vpop.f32.mrf.mxu0
  %1946 = vmatprep.mubr.f32.mxu0 0.0
  %1947 = vmatmul.mubr.f32.gmra.mxu0 %v785
  %v1948 = vpop.f32.mrf.mxu0
  %v1949 = vadd.f32 %v292, %v1948
  %v1950 = vpop.f32.mrf.mxu0
  %1951 = vmatprep.mubr.f32.mxu0 0.0
  %1952 = vmatmul.mubr.f32.gmra.mxu0 %v788
  %v1953 = vpop.f32.mrf.mxu0
  %v1954 = vadd.f32 %v292, %v1953
  %v1955 = vpop.f32.mrf.mxu0
  %1956 = vmatprep.mubr.f32.mxu0 0.0
  %1957 = vmatmul.mubr.f32.gmra.mxu0 %v791
  %v1958 = vpop.f32.mrf.mxu0
  %v1959 = vadd.f32 %v292, %v1958
  %v1960 = vpop.f32.mrf.mxu0
  %1961 = vmatprep.mubr.f32.mxu0 0.0
  %1962 = vmatmul.mubr.f32.gmra.mxu0 %v794
  %v1963 = vpop.f32.mrf.mxu0
  %v1964 = vadd.f32 %v292, %v1963
  %v1965 = vpop.f32.mrf.mxu0
  %1966 = vmatprep.mubr.f32.mxu0 0.0
  %1967 = vmatmul.mubr.f32.gmra.mxu0 %v797
  %v1968 = vpop.f32.mrf.mxu0
  %v1969 = vadd.f32 %v292, %v1968
  %v1970 = vpop.f32.mrf.mxu0
  %1971 = vmatprep.mubr.f32.mxu0 0.0
  %1972 = vmatmul.mubr.f32.gmra.mxu0 %v800
  %v1973 = vpop.f32.mrf.mxu0
  %v1974 = vadd.f32 %v292, %v1973
  %v1975 = vpop.f32.mrf.mxu0
  %1976 = vmatprep.mubr.f32.mxu0 0.0
  %1977 = vmatmul.mubr.f32.gmra.mxu0 %v803
  %v1978 = vpop.f32.mrf.mxu0
  %v1979 = vadd.f32 %v292, %v1978
  %v1980 = vpop.f32.mrf.mxu0
  %1981 = vmatprep.mubr.f32.mxu0 0.0
  %1982 = vmatmul.mubr.f32.gmra.mxu0 %v806
  %v1983 = vpop.f32.mrf.mxu0
  %v1984 = vadd.f32 %v292, %v1983
  %v1985 = vpop.f32.mrf.mxu0
  %1986 = vmatprep.mubr.f32.mxu0 0.0
  %1987 = vmatmul.mubr.f32.gmra.mxu0 %v809
  %v1988 = vpop.f32.mrf.mxu0
  %v1989 = vadd.f32 %v292, %v1988
  %v1990 = vpop.f32.mrf.mxu0
  %1991 = vmatprep.mubr.f32.mxu0 0.0
  %1992 = vmatmul.mubr.f32.gmra.mxu0 %v812
  %v1993 = vpop.f32.mrf.mxu0
  %v1994 = vadd.f32 %v292, %v1993
  %v1995 = vpop.f32.mrf.mxu0
  %1996 = vmatprep.mubr.f32.mxu0 0.0
  %1997 = vmatmul.mubr.f32.gmra.mxu0 %v815
  %v1998 = vpop.f32.mrf.mxu0
  %v1999 = vadd.f32 %v292, %v1998
  %v2000 = vpop.f32.mrf.mxu0
  %2001 = vmatprep.mubr.f32.mxu0 0.0
  %2002 = vmatmul.mubr.f32.gmra.mxu0 %v818
  %v2003 = vpop.f32.mrf.mxu0
  %v2004 = vadd.f32 %v292, %v2003
  %v2005 = vpop.f32.mrf.mxu0
  %2006 = vmatprep.mubr.f32.mxu0 0.0
  %2007 = vmatmul.mubr.f32.gmra.mxu0 %v821
  %v2008 = vpop.f32.mrf.mxu0
  %v2009 = vadd.f32 %v292, %v2008
  %v2010 = vpop.f32.mrf.mxu0
  %2011 = vmatprep.mubr.f32.mxu0 0.0
  %2012 = vmatmul.mubr.f32.gmra.mxu0 %v824
  %v2013 = vpop.f32.mrf.mxu0
  %v2014 = vadd.f32 %v292, %v2013
  %v2015 = vpop.f32.mrf.mxu0
  %2016 = vmatprep.mubr.f32.mxu0 0.0
  %2017 = vmatmul.mubr.f32.gmra.mxu0 %v827
  %v2018 = vpop.f32.mrf.mxu0
  %v2019 = vadd.f32 %v292, %v2018
  %v2020 = vpop.f32.mrf.mxu0
  %2021 = vmatprep.mubr.f32.mxu0 0.0
  %2022 = vmatmul.mubr.f32.gmra.mxu0 %v830
  %v2023 = vpop.f32.mrf.mxu0
  %v2024 = vadd.f32 %v292, %v2023
  %v2025 = vpop.f32.mrf.mxu0
  %2026 = vmatprep.mubr.f32.mxu0 0.0
  %2027 = vmatmul.mubr.f32.gmra.mxu0 %v833
  %v2028 = vpop.f32.mrf.mxu0
  %v2029 = vadd.f32 %v292, %v2028
  %v2030 = vpop.f32.mrf.mxu0
  %2031 = vmatprep.mubr.f32.mxu0 0.0
  %2032 = vmatmul.mubr.f32.gmra.mxu0 %v836
  %v2033 = vpop.f32.mrf.mxu0
  %v2034 = vadd.f32 %v292, %v2033
  %v2035 = vpop.f32.mrf.mxu0
  %2036 = vmatprep.mubr.f32.mxu0 0.0
  %2037 = vmatmul.mubr.f32.gmra.mxu0 %v839
  %v2038 = vpop.f32.mrf.mxu0
  %v2039 = vadd.f32 %v292, %v2038
  %v2040 = vpop.f32.mrf.mxu0
  %2041 = vmatprep.mubr.f32.mxu0 0.0
  %2042 = vmatmul.mubr.f32.gmra.mxu0 %v842
  %v2043 = vpop.f32.mrf.mxu0
  %v2044 = vadd.f32 %v292, %v2043
  %v2045 = vpop.f32.mrf.mxu0
  %2046 = vmatprep.mubr.f32.mxu0 0.0
  %2047 = vmatmul.mubr.f32.gmra.mxu0 %v845
  %v2048 = vpop.f32.mrf.mxu0
  %v2049 = vadd.f32 %v292, %v2048
  %v2050 = vpop.f32.mrf.mxu0
  %2051 = vmatprep.mubr.f32.mxu0 0.0
  %2052 = vmatmul.mubr.f32.gmra.mxu0 %v848
  %v2053 = vpop.f32.mrf.mxu0
  %v2054 = vadd.f32 %v292, %v2053
  %v2055 = vpop.f32.mrf.mxu0
  %2056 = vmatprep.mubr.f32.mxu0 0.0
  %2057 = vmatmul.mubr.f32.gmra.mxu0 %v851
  %v2058 = vpop.f32.mrf.mxu0
  %v2059 = vadd.f32 %v292, %v2058
  %v2060 = vpop.f32.mrf.mxu0
  %2061 = vmatprep.mubr.f32.mxu0 0.0
  %2062 = vmatmul.mubr.f32.gmra.mxu0 %v854
  %v2063 = vpop.f32.mrf.mxu0
  %v2064 = vadd.f32 %v292, %v2063
  %v2065 = vpop.f32.mrf.mxu0
  %2066 = vmatprep.mubr.f32.mxu0 0.0
  %2067 = vmatmul.mubr.f32.gmra.mxu0 %v857
  %v2068 = vpop.f32.mrf.mxu0
  %v2069 = vadd.f32 %v292, %v2068
  %v2070 = vpop.f32.mrf.mxu0
  %2071 = vmatprep.mubr.f32.mxu0 0.0
  %2072 = vmatmul.mubr.f32.gmra.mxu0 %v860
  %v2073 = vpop.f32.mrf.mxu0
  %v2074 = vadd.f32 %v292, %v2073
  %v2075 = vpop.f32.mrf.mxu0
  %2076 = vmatprep.mubr.f32.mxu0 0.0
  %2077 = vmatmul.mubr.f32.gmra.mxu0 %v863
  %v2078 = vpop.f32.mrf.mxu0
  %v2079 = vadd.f32 %v292, %v2078
  %v2080 = vpop.f32.mrf.mxu0
  %2081 = vmatprep.mubr.f32.mxu0 0.0
  %2082 = vmatmul.mubr.f32.gmra.mxu0 %v866
  %v2083 = vpop.f32.mrf.mxu0
  %v2084 = vadd.f32 %v292, %v2083
  %v2085 = vpop.f32.mrf.mxu0
  %2086 = vmatprep.mubr.f32.mxu0 0.0
  %2087 = vmatmul.mubr.f32.gmra.mxu0 %v869
  %v2088 = vpop.f32.mrf.mxu0
  %v2089 = vadd.f32 %v292, %v2088
  %v2090 = vpop.f32.mrf.mxu0
  %2091 = vmatprep.mubr.f32.mxu0 0.0
  %2092 = vmatmul.mubr.f32.gmra.mxu0 %v872
  %v2093 = vpop.f32.mrf.mxu0
  %v2094 = vadd.f32 %v292, %v2093
  %v2095 = vpop.f32.mrf.mxu0
  %2096 = vmatprep.mubr.f32.mxu0 0.0
  %2097 = vmatmul.mubr.f32.gmra.mxu0 %v875
  %v2098 = vpop.f32.mrf.mxu0
  %v2099 = vadd.f32 %v292, %v2098
  %v2100 = vpop.f32.mrf.mxu0
  %2101 = vmatprep.mubr.f32.mxu0 0.0
  %2102 = vmatmul.mubr.f32.gmra.mxu0 %v878
  %v2103 = vpop.f32.mrf.mxu0
  %v2104 = vadd.f32 %v292, %v2103
  %v2105 = vpop.f32.mrf.mxu0
  %2106 = vmatprep.mubr.f32.mxu0 0.0
  %2107 = vmatmul.mubr.f32.gmra.mxu0 %v881
  %v2108 = vpop.f32.mrf.mxu0
  %v2109 = vadd.f32 %v292, %v2108
  %v2110 = vpop.f32.mrf.mxu0
  %2111 = vmatprep.mubr.f32.mxu0 0.0
  %2112 = vmatmul.mubr.f32.gmra.mxu0 %v884
  %v2113 = vpop.f32.mrf.mxu0
  %v2114 = vadd.f32 %v292, %v2113
  %v2115 = vpop.f32.mrf.mxu0
  %2116 = vmatprep.mubr.f32.mxu0 0.0
  %2117 = vmatmul.mubr.f32.gmra.mxu0 %v887
  %v2118 = vpop.f32.mrf.mxu0
  %v2119 = vadd.f32 %v292, %v2118
  %v2120 = vpop.f32.mrf.mxu0
  %2121 = vmatprep.mubr.f32.mxu0 0.0
  %2122 = vmatmul.mubr.f32.gmra.mxu0 %v890
  %v2123 = vpop.f32.mrf.mxu0
  %v2124 = vadd.f32 %v292, %v2123
  %v2125 = vpop.f32.mrf.mxu0
  %2126 = vmatprep.mubr.f32.mxu0 0.0
  %2127 = vmatmul.mubr.f32.gmra.mxu0 %v893
  %v2128 = vpop.f32.mrf.mxu0
  %v2129 = vadd.f32 %v292, %v2128
  %v2130 = vpop.f32.mrf.mxu0
  %2131 = vmatprep.mubr.f32.mxu0 0.0
  %2132 = vmatmul.mubr.f32.gmra.mxu0 %v896
  %v2133 = vpop.f32.mrf.mxu0
  %v2134 = vadd.f32 %v292, %v2133
  %v2135 = vpop.f32.mrf.mxu0
  %2136 = vmatprep.mubr.f32.mxu0 0.0
  %2137 = vmatmul.mubr.f32.gmra.mxu0 %v899
  %v2138 = vpop.f32.mrf.mxu0
  %v2139 = vadd.f32 %v292, %v2138
  %v2140 = vpop.f32.mrf.mxu0
  %2141 = vmatprep.mubr.f32.mxu0 0.0
  %2142 = vmatmul.mubr.f32.gmra.mxu0 %v902
  %v2143 = vpop.f32.mrf.mxu0
  %v2144 = vadd.f32 %v292, %v2143
  %v2145 = vpop.f32.mrf.mxu0
  %2146 = vmatprep.mubr.f32.mxu0 0.0
  %2147 = vmatmul.mubr.f32.gmra.mxu0 %v905
  %v2148 = vpop.f32.mrf.mxu0
  %v2149 = vadd.f32 %v292, %v2148
  %v2150 = vpop.f32.mrf.mxu0
  %2151 = vmatprep.mubr.f32.mxu0 0.0
  %2152 = vmatmul.mubr.f32.gmra.mxu0 %v908
  %v2153 = vpop.f32.mrf.mxu0
  %v2154 = vadd.f32 %v292, %v2153
  %v2155 = vpop.f32.mrf.mxu0
  %2156 = vmatprep.mubr.f32.mxu0 0.0
  %2157 = vmatmul.mubr.f32.gmra.mxu0 %v911
  %v2158 = vpop.f32.mrf.mxu0
  %v2159 = vadd.f32 %v292, %v2158
  %v2160 = vpop.f32.mrf.mxu0
  %2161 = vmatprep.mubr.f32.mxu0 0.0
  %2162 = vmatmul.mubr.f32.gmra.mxu0 %v914
  %v2163 = vpop.f32.mrf.mxu0
  %v2164 = vadd.f32 %v292, %v2163
  %v2165 = vpop.f32.mrf.mxu0
  %2166 = vmatprep.mubr.f32.mxu0 0.0
  %2167 = vmatmul.mubr.f32.gmra.mxu0 %v917
  %v2168 = vpop.f32.mrf.mxu0
  %v2169 = vadd.f32 %v292, %v2168
  %v2170 = vpop.f32.mrf.mxu0
  %2171 = vmatprep.mubr.f32.mxu0 0.0
  %2172 = vmatmul.mubr.f32.gmra.mxu0 %v920
  %v2173 = vpop.f32.mrf.mxu0
  %v2174 = vadd.f32 %v292, %v2173
  %v2175 = vpop.f32.mrf.mxu0
  %2176 = vmatprep.mubr.f32.mxu0 0.0
  %2177 = vmatmul.mubr.f32.gmra.mxu0 %v923
  %v2178 = vpop.f32.mrf.mxu0
  %v2179 = vadd.f32 %v292, %v2178
  %v2180 = vpop.f32.mrf.mxu0
  %2181 = vmatprep.mubr.f32.mxu0 0.0
  %2182 = vmatmul.mubr.f32.gmra.mxu0 %v926
  %v2183 = vpop.f32.mrf.mxu0
  %v2184 = vadd.f32 %v292, %v2183
  %v2185 = vpop.f32.mrf.mxu0
  %2186 = vmatprep.mubr.f32.mxu0 0.0
  %2187 = vmatmul.mubr.f32.gmra.mxu0 %v929
  %v2188 = vpop.f32.mrf.mxu0
  %v2189 = vadd.f32 %v292, %v2188
  %v2190 = vpop.f32.mrf.mxu0
  %2191 = vmatprep.mubr.f32.mxu0 0.0
  %2192 = vmatmul.mubr.f32.gmra.mxu0 %v932
  %v2193 = vpop.f32.mrf.mxu0
  %v2194 = vadd.f32 %v292, %v2193
  %v2195 = vpop.f32.mrf.mxu0
  %2196 = vmatprep.mubr.f32.mxu0 0.0
  %2197 = vmatmul.mubr.f32.gmra.mxu0 %v935
  %v2198 = vpop.f32.mrf.mxu0
  %v2199 = vadd.f32 %v292, %v2198
  %v2200 = vpop.f32.mrf.mxu0
  %2201 = vmatprep.mubr.f32.mxu0 0.0
  %2202 = vmatmul.mubr.f32.gmra.mxu0 %v938
  %v2203 = vpop.f32.mrf.mxu0
  %v2204 = vadd.f32 %v292, %v2203
  %v2205 = vpop.f32.mrf.mxu0
  %2206 = vmatprep.mubr.f32.mxu0 0.0
  %2207 = vmatmul.mubr.f32.gmra.mxu0 %v941
  %v2208 = vpop.f32.mrf.mxu0
  %v2209 = vadd.f32 %v292, %v2208
  %v2210 = vpop.f32.mrf.mxu0
  %2211 = vmatprep.mubr.f32.mxu0 0.0
  %2212 = vmatmul.mubr.f32.gmra.mxu0 %v944
  %v2213 = vpop.f32.mrf.mxu0
  %v2214 = vadd.f32 %v292, %v2213
  %v2215 = vpop.f32.mrf.mxu0
  %2216 = vmatprep.mubr.f32.mxu0 0.0
  %2217 = vmatmul.mubr.f32.gmra.mxu0 %v947
  %v2218 = vpop.f32.mrf.mxu0
  %v2219 = vadd.f32 %v292, %v2218
  %v2220 = vpop.f32.mrf.mxu0
  %2221 = vmatprep.mubr.f32.mxu0 0.0
  %2222 = vmatmul.mubr.f32.gmra.mxu0 %v950
  %v2223 = vpop.f32.mrf.mxu0
  %v2224 = vadd.f32 %v292, %v2223
  %v2225 = vpop.f32.mrf.mxu0
  %2226 = vmatprep.mubr.f32.mxu0 0.0
  %2227 = vmatmul.mubr.f32.gmra.mxu0 %v953
  %v2228 = vpop.f32.mrf.mxu0
  %v2229 = vadd.f32 %v292, %v2228
  %v2230 = vpop.f32.mrf.mxu0
  %2231 = vmatprep.mubr.f32.mxu0 0.0
  %2232 = vmatmul.mubr.f32.gmra.mxu0 %v956
  %v2233 = vpop.f32.mrf.mxu0
  %v2234 = vadd.f32 %v292, %v2233
  %v2235 = vpop.f32.mrf.mxu0
  %2236 = vmatprep.mubr.f32.mxu0 0.0
  %2237 = vmatmul.mubr.f32.gmra.mxu0 %v959
  %v2238 = vpop.f32.mrf.mxu0
  %v2239 = vadd.f32 %v292, %v2238
  %v2240 = vpop.f32.mrf.mxu0
  %2241 = vmatprep.mubr.f32.mxu0 0.0
  %2242 = vmatmul.mubr.f32.gmra.mxu0 %v962
  %v2243 = vpop.f32.mrf.mxu0
  %v2244 = vadd.f32 %v292, %v2243
  %v2245 = vpop.f32.mrf.mxu0
  %2246 = vmatprep.mubr.f32.mxu0 0.0
  %2247 = vmatmul.mubr.f32.gmra.mxu0 %v965
  %v2248 = vpop.f32.mrf.mxu0
  %v2249 = vadd.f32 %v292, %v2248
  %v2250 = vpop.f32.mrf.mxu0
  %2251 = vmatprep.mubr.f32.mxu0 0.0
  %2252 = vmatmul.mubr.f32.gmra.mxu0 %v968
  %v2253 = vpop.f32.mrf.mxu0
  %v2254 = vadd.f32 %v292, %v2253
  %v2255 = vpop.f32.mrf.mxu0
  %2256 = vmatprep.mubr.f32.mxu0 0.0
  %2257 = vmatmul.mubr.f32.gmra.mxu0 %v971
  %v2258 = vpop.f32.mrf.mxu0
  %v2259 = vadd.f32 %v292, %v2258
  %v2260 = vpop.f32.mrf.mxu0
  %2261 = vmatprep.mubr.f32.mxu0 0.0
  %2262 = vmatmul.mubr.f32.gmra.mxu0 %v974
  %v2263 = vpop.f32.mrf.mxu0
  %v2264 = vadd.f32 %v292, %v2263
  %v2265 = vpop.f32.mrf.mxu0
  %2266 = vmatprep.mubr.f32.mxu0 0.0
  %2267 = vmatmul.mubr.f32.gmra.mxu0 %v977
  %v2268 = vpop.f32.mrf.mxu0
  %v2269 = vadd.f32 %v292, %v2268
  %v2270 = vpop.f32.mrf.mxu0
  %2271 = vmatprep.mubr.f32.mxu0 0.0
  %2272 = vmatmul.mubr.f32.gmra.mxu0 %v980
  %v2273 = vpop.f32.mrf.mxu0
  %v2274 = vadd.f32 %v292, %v2273
  %v2275 = vpop.f32.mrf.mxu0
  %2276 = vmatprep.mubr.f32.mxu0 0.0
  %2277 = vmatmul.mubr.f32.gmra.mxu0 %v983
  %v2278 = vpop.f32.mrf.mxu0
  %v2279 = vadd.f32 %v292, %v2278
  %v2280 = vpop.f32.mrf.mxu0
  %2281 = vmatprep.mubr.f32.mxu0 0.0
  %2282 = vmatmul.mubr.f32.gmra.mxu0 %v986
  %v2283 = vpop.f32.mrf.mxu0
  %v2284 = vadd.f32 %v292, %v2283
  %v2285 = vpop.f32.mrf.mxu0
  %2286 = vmatprep.mubr.f32.mxu0 0.0
  %2287 = vmatmul.mubr.f32.gmra.mxu0 %v989
  %v2288 = vpop.f32.mrf.mxu0
  %v2289 = vadd.f32 %v292, %v2288
  %v2290 = vpop.f32.mrf.mxu0
  %2291 = vmatprep.mubr.f32.mxu0 0.0
  %2292 = vmatmul.mubr.f32.gmra.mxu0 %v992
  %v2293 = vpop.f32.mrf.mxu0
  %v2294 = vadd.f32 %v292, %v2293
  %v2295 = vpop.f32.mrf.mxu0
  %2296 = vmatprep.mubr.f32.mxu0 0.0
  %2297 = vmatmul.mubr.f32.gmra.mxu0 %v995
  %v2298 = vpop.f32.mrf.mxu0
  %v2299 = vadd.f32 %v292, %v2298
  %v2300 = vpop.f32.mrf.mxu0
  %2301 = vmatprep.mubr.f32.mxu0 0.0
  %2302 = vmatmul.mubr.f32.gmra.mxu0 %v998
  %v2303 = vpop.f32.mrf.mxu0
  %v2304 = vadd.f32 %v292, %v2303
  %v2305 = vpop.f32.mrf.mxu0
  %2306 = vmatprep.mubr.f32.mxu0 0.0
  %2307 = vmatmul.mubr.f32.gmra.mxu0 %v1001
  %v2308 = vpop.f32.mrf.mxu0
  %v2309 = vadd.f32 %v292, %v2308
  %v2310 = vpop.f32.mrf.mxu0
  %2311 = vmatprep.mubr.f32.mxu0 0.0
  %2312 = vmatmul.mubr.f32.gmra.mxu0 %v1004
  %v2313 = vpop.f32.mrf.mxu0
  %v2314 = vadd.f32 %v292, %v2313
  %v2315 = vpop.f32.mrf.mxu0
  %2316 = vmatprep.mubr.f32.mxu0 0.0
  %2317 = vmatmul.mubr.f32.gmra.mxu0 %v1007
  %v2318 = vpop.f32.mrf.mxu0
  %v2319 = vadd.f32 %v292, %v2318
  %v2320 = vpop.f32.mrf.mxu0
  %2321 = vmatprep.mubr.f32.mxu0 0.0
  %2322 = vmatmul.mubr.f32.gmra.mxu0 %v1010
  %v2323 = vpop.f32.mrf.mxu0
  %v2324 = vadd.f32 %v292, %v2323
  %v2325 = vpop.f32.mrf.mxu0
  %2326 = vmatprep.mubr.f32.mxu0 0.0
  %2327 = vmatmul.mubr.f32.gmra.mxu0 %v1013
  %v2328 = vpop.f32.mrf.mxu0
  %v2329 = vadd.f32 %v292, %v2328
  %v2330 = vpop.f32.mrf.mxu0
  %2331 = vmatprep.mubr.f32.mxu0 0.0
  %2332 = vmatmul.mubr.f32.gmra.mxu0 %v1016
  %v2333 = vpop.f32.mrf.mxu0
  %v2334 = vadd.f32 %v292, %v2333
  %v2335 = vpop.f32.mrf.mxu0
  %2336 = vmatprep.mubr.f32.mxu0 0.0
  %2337 = vmatmul.mubr.f32.gmra.mxu0 %v1019
  %v2338 = vpop.f32.mrf.mxu0
  %v2339 = vadd.f32 %v292, %v2338
  %v2340 = vpop.f32.mrf.mxu0
  %2341 = vmatprep.mubr.f32.mxu0 0.0
  %2342 = vmatmul.mubr.f32.gmra.mxu0 %v1022
  %v2343 = vpop.f32.mrf.mxu0
  %v2344 = vadd.f32 %v292, %v2343
  %v2345 = vpop.f32.mrf.mxu0
  %2346 = vmatprep.mubr.f32.mxu0 0.0
  %2347 = vmatmul.mubr.f32.gmra.mxu0 %v1025
  %v2348 = vpop.f32.mrf.mxu0
  %v2349 = vadd.f32 %v292, %v2348
  %v2350 = vpop.f32.mrf.mxu0
  %2351 = vmatprep.mubr.f32.mxu0 0.0
  %2352 = vmatmul.mubr.f32.gmra.mxu0 %v1028
  %v2353 = vpop.f32.mrf.mxu0
  %v2354 = vadd.f32 %v292, %v2353
  %v2355 = vpop.f32.mrf.mxu0
  %2356 = vmatprep.mubr.f32.mxu0 0.0
  %2357 = vmatmul.mubr.f32.gmra.mxu0 %v1031
  %v2358 = vpop.f32.mrf.mxu0
  %v2359 = vadd.f32 %v292, %v2358
  %v2360 = vpop.f32.mrf.mxu0
  %2361 = vmatprep.mubr.f32.mxu0 0.0
  %2362 = vmatmul.mubr.f32.gmra.mxu0 %v1034
  %v2363 = vpop.f32.mrf.mxu0
  %v2364 = vadd.f32 %v292, %v2363
  %v2365 = vpop.f32.mrf.mxu0
  %2366 = vmatprep.mubr.f32.mxu0 0.0
  %2367 = vmatmul.mubr.f32.gmra.mxu0 %v1037
  %v2368 = vpop.f32.mrf.mxu0
  %v2369 = vadd.f32 %v292, %v2368
  %v2370 = vpop.f32.mrf.mxu0
  %2371 = vmatprep.mubr.f32.mxu0 0.0
  %2372 = vmatmul.mubr.f32.gmra.mxu0 %v1040
  %v2373 = vpop.f32.mrf.mxu0
  %v2374 = vadd.f32 %v292, %v2373
  %v2375 = vpop.f32.mrf.mxu0
  %2376 = vmatprep.mubr.f32.mxu0 0.0
  %2377 = vmatmul.mubr.f32.gmra.mxu0 %v1043
  %v2378 = vpop.f32.mrf.mxu0
  %v2379 = vadd.f32 %v292, %v2378
  %v2380 = vpop.f32.mrf.mxu0
  %2381 = vmatprep.mubr.f32.mxu0 0.0
  %2382 = vmatmul.mubr.f32.gmra.mxu0 %v1046
  %v2383 = vpop.f32.mrf.mxu0
  %v2384 = vadd.f32 %v292, %v2383
  %v2385 = vpop.f32.mrf.mxu0
  %2386 = vmatprep.mubr.f32.mxu0 0.0
  %2387 = vmatmul.mubr.f32.gmra.mxu0 %v1049
  %v2388 = vpop.f32.mrf.mxu0
  %v2389 = vadd.f32 %v292, %v2388
  %v2390 = vpop.f32.mrf.mxu0
  %2391 = vmatprep.mubr.f32.mxu0 0.0
  %2392 = vmatmul.mubr.f32.gmra.mxu0 %v1052
  %v2393 = vpop.f32.mrf.mxu0
  %v2394 = vadd.f32 %v292, %v2393
  %v2395 = vpop.f32.mrf.mxu0
  %2396 = vmatprep.mubr.f32.mxu0 0.0
  %2397 = vmatmul.mubr.f32.gmra.mxu0 %v1055
  %v2398 = vpop.f32.mrf.mxu0
  %v2399 = vadd.f32 %v292, %v2398
  %v2400 = vpop.f32.mrf.mxu0
  %2401 = vmatprep.mubr.f32.mxu0 0.0
  %2402 = vmatmul.mubr.f32.gmra.mxu0 %v1058
  %v2403 = vpop.f32.mrf.mxu0
  %v2404 = vadd.f32 %v292, %v2403
  %v2405 = vpop.f32.mrf.mxu0
  %2406 = vmatprep.mubr.f32.mxu0 0.0
  %2407 = vmatmul.mubr.f32.gmra.mxu0 %v1061
  %v2408 = vpop.f32.mrf.mxu0
  %v2409 = vadd.f32 %v292, %v2408
  %v2410 = vpop.f32.mrf.mxu0
  %2411 = vdwg.mxu0
  %v2412 = vmax.f32 %v1134, 0.0
  %v2413 = vmax.f32 %v1139, 0.0
  %v2414 = vmax.f32 %v1144, 0.0
  %v2415 = vmax.f32 %v1149, 0.0
  %v2416 = vmax.f32 %v1154, 0.0
  %v2417 = vmax.f32 %v1159, 0.0
  %v2418 = vmax.f32 %v1164, 0.0
  %v2419 = vmax.f32 %v1169, 0.0
  %v2420 = vmax.f32 %v1174, 0.0
  %v2421 = vmax.f32 %v1179, 0.0
  %v2422 = vmax.f32 %v1184, 0.0
  %v2423 = vmax.f32 %v1189, 0.0
  %v2424 = vmax.f32 %v1194, 0.0
  %v2425 = vmax.f32 %v1199, 0.0
  %v2426 = vmax.f32 %v1204, 0.0
  %v2427 = vmax.f32 %v1209, 0.0
  %v2428 = vmax.f32 %v1214, 0.0
  %v2429 = vmax.f32 %v1219, 0.0
  %v2430 = vmax.f32 %v1224, 0.0
  %v2431 = vmax.f32 %v1229, 0.0
  %v2432 = vmax.f32 %v1234, 0.0
  %v2433 = vmax.f32 %v1239, 0.0
  %v2434 = vmax.f32 %v1244, 0.0
  %v2435 = vmax.f32 %v1249, 0.0
  %v2436 = vmax.f32 %v1254, 0.0
  %v2437 = vmax.f32 %v1259, 0.0
  %v2438 = vmax.f32 %v1264, 0.0
  %v2439 = vmax.f32 %v1269, 0.0
  %v2440 = vmax.f32 %v1274, 0.0
  %v2441 = vmax.f32 %v1279, 0.0
  %v2442 = vmax.f32 %v1284, 0.0
  %v2443 = vmax.f32 %v1289, 0.0
  %v2444 = vmax.f32 %v1294, 0.0
  %v2445 = vmax.f32 %v1299, 0.0
  %v2446 = vmax.f32 %v1304, 0.0
  %v2447 = vmax.f32 %v1309, 0.0
  %v2448 = vmax.f32 %v1314, 0.0
  %v2449 = vmax.f32 %v1319, 0.0
  %v2450 = vmax.f32 %v1324, 0.0
  %v2451 = vmax.f32 %v1329, 0.0
  %v2452 = vmax.f32 %v1334, 0.0
  %v2453 = vmax.f32 %v1339, 0.0
  %v2454 = vmax.f32 %v1344, 0.0
  %v2455 = vmax.f32 %v1349, 0.0
  %v2456 = vmax.f32 %v1354, 0.0
  %v2457 = vmax.f32 %v1359, 0.0
  %v2458 = vmax.f32 %v1364, 0.0
  %v2459 = vmax.f32 %v1369, 0.0
  %v2460 = vmax.f32 %v1374, 0.0
  %v2461 = vmax.f32 %v1379, 0.0
  %v2462 = vmax.f32 %v1384, 0.0
  %v2463 = vmax.f32 %v1389, 0.0
  %v2464 = vmax.f32 %v1394, 0.0
  %v2465 = vmax.f32 %v1399, 0.0
  %v2466 = vmax.f32 %v1404, 0.0
  %v2467 = vmax.f32 %v1409, 0.0
  %v2468 = vmax.f32 %v1414, 0.0
  %v2469 = vmax.f32 %v1419, 0.0
  %v2470 = vmax.f32 %v1424, 0.0
  %v2471 = vmax.f32 %v1429, 0.0
  %v2472 = vmax.f32 %v1434, 0.0
  %v2473 = vmax.f32 %v1439, 0.0
  %v2474 = vmax.f32 %v1444, 0.0
  %v2475 = vmax.f32 %v1449, 0.0
  %v2476 = vmax.f32 %v1454, 0.0
  %v2477 = vmax.f32 %v1459, 0.0
  %v2478 = vmax.f32 %v1464, 0.0
  %v2479 = vmax.f32 %v1469, 0.0
  %v2480 = vmax.f32 %v1474, 0.0
  %v2481 = vmax.f32 %v1479, 0.0
  %v2482 = vmax.f32 %v1484, 0.0
  %v2483 = vmax.f32 %v1489, 0.0
  %v2484 = vmax.f32 %v1494, 0.0
  %v2485 = vmax.f32 %v1499, 0.0
  %v2486 = vmax.f32 %v1504, 0.0
  %v2487 = vmax.f32 %v1509, 0.0
  %v2488 = vmax.f32 %v1514, 0.0
  %v2489 = vmax.f32 %v1519, 0.0
  %v2490 = vmax.f32 %v1524, 0.0
  %v2491 = vmax.f32 %v1529, 0.0
  %v2492 = vmax.f32 %v1534, 0.0
  %v2493 = vmax.f32 %v1539, 0.0
  %v2494 = vmax.f32 %v1544, 0.0
  %v2495 = vmax.f32 %v1549, 0.0
  %v2496 = vmax.f32 %v1554, 0.0
  %v2497 = vmax.f32 %v1559, 0.0
  %v2498 = vmax.f32 %v1564, 0.0
  %v2499 = vmax.f32 %v1569, 0.0
  %v2500 = vmax.f32 %v1574, 0.0
  %v2501 = vmax.f32 %v1579, 0.0
  %v2502 = vmax.f32 %v1584, 0.0
  %v2503 = vmax.f32 %v1589, 0.0
  %v2504 = vmax.f32 %v1594, 0.0
  %v2505 = vmax.f32 %v1599, 0.0
  %v2506 = vmax.f32 %v1604, 0.0
  %v2507 = vmax.f32 %v1609, 0.0
  %v2508 = vmax.f32 %v1614, 0.0
  %v2509 = vmax.f32 %v1619, 0.0
  %v2510 = vmax.f32 %v1624, 0.0
  %v2511 = vmax.f32 %v1629, 0.0
  %v2512 = vmax.f32 %v1634, 0.0
  %v2513 = vmax.f32 %v1639, 0.0
  %v2514 = vmax.f32 %v1644, 0.0
  %v2515 = vmax.f32 %v1649, 0.0
  %v2516 = vmax.f32 %v1654, 0.0
  %v2517 = vmax.f32 %v1659, 0.0
  %v2518 = vmax.f32 %v1664, 0.0
  %v2519 = vmax.f32 %v1669, 0.0
  %v2520 = vmax.f32 %v1674, 0.0
  %v2521 = vmax.f32 %v1679, 0.0
  %v2522 = vmax.f32 %v1684, 0.0
  %v2523 = vmax.f32 %v1689, 0.0
  %v2524 = vmax.f32 %v1694, 0.0
  %v2525 = vmax.f32 %v1699, 0.0
  %v2526 = vmax.f32 %v1704, 0.0
  %v2527 = vmax.f32 %v1709, 0.0
  %v2528 = vmax.f32 %v1714, 0.0
  %v2529 = vmax.f32 %v1719, 0.0
  %v2530 = vmax.f32 %v1724, 0.0
  %v2531 = vmax.f32 %v1729, 0.0
  %v2532 = vmax.f32 %v1734, 0.0
  %v2533 = vmax.f32 %v1739, 0.0
  %v2534 = vmax.f32 %v1744, 0.0
  %v2535 = vmax.f32 %v1749, 0.0
  %v2536 = vmax.f32 %v1754, 0.0
  %v2537 = vmax.f32 %v1759, 0.0
  %v2538 = vmax.f32 %v1764, 0.0
  %v2539 = vmax.f32 %v1769, 0.0
  %v2540 = vmax.f32 %v1774, 0.0
  %v2541 = vmax.f32 %v1779, 0.0
  %v2542 = vmax.f32 %v1784, 0.0
  %v2543 = vmax.f32 %v1789, 0.0
  %v2544 = vmax.f32 %v1794, 0.0
  %v2545 = vmax.f32 %v1799, 0.0
  %v2546 = vmax.f32 %v1804, 0.0
  %v2547 = vmax.f32 %v1809, 0.0
  %v2548 = vmax.f32 %v1814, 0.0
  %v2549 = vmax.f32 %v1819, 0.0
  %v2550 = vmax.f32 %v1824, 0.0
  %v2551 = vmax.f32 %v1829, 0.0
  %v2552 = vmax.f32 %v1834, 0.0
  %v2553 = vmax.f32 %v1839, 0.0
  %v2554 = vmax.f32 %v1844, 0.0
  %v2555 = vmax.f32 %v1849, 0.0
  %v2556 = vmax.f32 %v1854, 0.0
  %v2557 = vmax.f32 %v1859, 0.0
  %v2558 = vmax.f32 %v1864, 0.0
  %v2559 = vmax.f32 %v1869, 0.0
  %v2560 = vmax.f32 %v1874, 0.0
  %v2561 = vmax.f32 %v1879, 0.0
  %v2562 = vmax.f32 %v1884, 0.0
  %v2563 = vmax.f32 %v1889, 0.0
  %v2564 = vmax.f32 %v1894, 0.0
  %v2565 = vmax.f32 %v1899, 0.0
  %v2566 = vmax.f32 %v1904, 0.0
  %v2567 = vmax.f32 %v1909, 0.0
  %v2568 = vmax.f32 %v1914, 0.0
  %v2569 = vmax.f32 %v1919, 0.0
  %v2570 = vmax.f32 %v1924, 0.0
  %v2571 = vmax.f32 %v1929, 0.0
  %v2572 = vmax.f32 %v1934, 0.0
  %v2573 = vmax.f32 %v1939, 0.0
  %v2574 = vmax.f32 %v1944, 0.0
  %v2575 = vmax.f32 %v1949, 0.0
  %v2576 = vmax.f32 %v1954, 0.0
  %v2577 = vmax.f32 %v1959, 0.0
  %v2578 = vmax.f32 %v1964, 0.0
  %v2579 = vmax.f32 %v1969, 0.0
  %v2580 = vmax.f32 %v1974, 0.0
  %v2581 = vmax.f32 %v1979, 0.0
  %v2582 = vmax.f32 %v1984, 0.0
  %v2583 = vmax.f32 %v1989, 0.0
  %v2584 = vmax.f32 %v1994, 0.0
  %v2585 = vmax.f32 %v1999, 0.0
  %v2586 = vmax.f32 %v2004, 0.0
  %v2587 = vmax.f32 %v2009, 0.0
  %v2588 = vmax.f32 %v2014, 0.0
  %v2589 = vmax.f32 %v2019, 0.0
  %v2590 = vmax.f32 %v2024, 0.0
  %v2591 = vmax.f32 %v2029, 0.0
  %v2592 = vmax.f32 %v2034, 0.0
  %v2593 = vmax.f32 %v2039, 0.0
  %v2594 = vmax.f32 %v2044, 0.0
  %v2595 = vmax.f32 %v2049, 0.0
  %v2596 = vmax.f32 %v2054, 0.0
  %v2597 = vmax.f32 %v2059, 0.0
  %v2598 = vmax.f32 %v2064, 0.0
  %v2599 = vmax.f32 %v2069, 0.0
  %v2600 = vmax.f32 %v2074, 0.0
  %v2601 = vmax.f32 %v2079, 0.0
  %v2602 = vmax.f32 %v2084, 0.0
  %v2603 = vmax.f32 %v2089, 0.0
  %v2604 = vmax.f32 %v2094, 0.0
  %v2605 = vmax.f32 %v2099, 0.0
  %v2606 = vmax.f32 %v2104, 0.0
  %v2607 = vmax.f32 %v2109, 0.0
  %v2608 = vmax.f32 %v2114, 0.0
  %v2609 = vmax.f32 %v2119, 0.0
  %v2610 = vmax.f32 %v2124, 0.0
  %v2611 = vmax.f32 %v2129, 0.0
  %v2612 = vmax.f32 %v2134, 0.0
  %v2613 = vmax.f32 %v2139, 0.0
  %v2614 = vmax.f32 %v2144, 0.0
  %v2615 = vmax.f32 %v2149, 0.0
  %v2616 = vmax.f32 %v2154, 0.0
  %v2617 = vmax.f32 %v2159, 0.0
  %v2618 = vmax.f32 %v2164, 0.0
  %v2619 = vmax.f32 %v2169, 0.0
  %v2620 = vmax.f32 %v2174, 0.0
  %v2621 = vmax.f32 %v2179, 0.0
  %v2622 = vmax.f32 %v2184, 0.0
  %v2623 = vmax.f32 %v2189, 0.0
  %v2624 = vmax.f32 %v2194, 0.0
  %v2625 = vmax.f32 %v2199, 0.0
  %v2626 = vmax.f32 %v2204, 0.0
  %v2627 = vmax.f32 %v2209, 0.0
  %v2628 = vmax.f32 %v2214, 0.0
  %v2629 = vmax.f32 %v2219, 0.0
  %v2630 = vmax.f32 %v2224, 0.0
  %v2631 = vmax.f32 %v2229, 0.0
  %v2632 = vmax.f32 %v2234, 0.0
  %v2633 = vmax.f32 %v2239, 0.0
  %v2634 = vmax.f32 %v2244, 0.0
  %v2635 = vmax.f32 %v2249, 0.0
  %v2636 = vmax.f32 %v2254, 0.0
  %v2637 = vmax.f32 %v2259, 0.0
  %v2638 = vmax.f32 %v2264, 0.0
  %v2639 = vmax.f32 %v2269, 0.0
  %v2640 = vmax.f32 %v2274, 0.0
  %v2641 = vmax.f32 %v2279, 0.0
  %v2642 = vmax.f32 %v2284, 0.0
  %v2643 = vmax.f32 %v2289, 0.0
  %v2644 = vmax.f32 %v2294, 0.0
  %v2645 = vmax.f32 %v2299, 0.0
  %v2646 = vmax.f32 %v2304, 0.0
  %v2647 = vmax.f32 %v2309, 0.0
  %v2648 = vmax.f32 %v2314, 0.0
  %v2649 = vmax.f32 %v2319, 0.0
  %v2650 = vmax.f32 %v2324, 0.0
  %v2651 = vmax.f32 %v2329, 0.0
  %v2652 = vmax.f32 %v2334, 0.0
  %v2653 = vmax.f32 %v2339, 0.0
  %v2654 = vmax.f32 %v2344, 0.0
  %v2655 = vmax.f32 %v2349, 0.0
  %v2656 = vmax.f32 %v2354, 0.0
  %v2657 = vmax.f32 %v2359, 0.0
  %v2658 = vmax.f32 %v2364, 0.0
  %v2659 = vmax.f32 %v2369, 0.0
  %v2660 = vmax.f32 %v2374, 0.0
  %v2661 = vmax.f32 %v2379, 0.0
  %v2662 = vmax.f32 %v2384, 0.0
  %v2663 = vmax.f32 %v2389, 0.0
  %v2664 = vmax.f32 %v2394, 0.0
  %v2665 = vmax.f32 %v2399, 0.0
  %v2666 = vmax.f32 %v2404, 0.0
  %v2667 = vmax.f32 %v2409, 0.0
  %vm2668 = vcmask 261120
  %v2669 = vsel %vm2668, %v2412, 0.0
  %v2670 = vsel %vm2668, %v2413, 0.0
  %v2671 = vadd.f32 %v2669, %v2670
  %v2672 = vsel %vm2668, %v2414, 0.0
  %v2673 = vadd.f32 %v2671, %v2672
  %v2674 = vsel %vm2668, %v2415, 0.0
  %v2675 = vadd.f32 %v2673, %v2674
  %v2676 = vsel %vm2668, %v2416, 0.0
  %v2677 = vadd.f32 %v2675, %v2676
  %v2678 = vsel %vm2668, %v2417, 0.0
  %v2679 = vadd.f32 %v2677, %v2678
  %v2680 = vsel %vm2668, %v2418, 0.0
  %v2681 = vadd.f32 %v2679, %v2680
  %v2682 = vsel %vm2668, %v2419, 0.0
  %v2683 = vadd.f32 %v2681, %v2682
  %v2684 = vsel %vm2668, %v2420, 0.0
  %v2685 = vadd.f32 %v2683, %v2684
  %v2686 = vsel %vm2668, %v2421, 0.0
  %v2687 = vadd.f32 %v2685, %v2686
  %v2688 = vsel %vm2668, %v2422, 0.0
  %v2689 = vadd.f32 %v2687, %v2688
  %v2690 = vsel %vm2668, %v2423, 0.0
  %v2691 = vadd.f32 %v2689, %v2690
  %v2692 = vsel %vm2668, %v2424, 0.0
  %v2693 = vadd.f32 %v2691, %v2692
  %v2694 = vsel %vm2668, %v2425, 0.0
  %v2695 = vadd.f32 %v2693, %v2694
  %v2696 = vsel %vm2668, %v2426, 0.0
  %v2697 = vadd.f32 %v2695, %v2696
  %v2698 = vsel %vm2668, %v2427, 0.0
  %v2699 = vadd.f32 %v2697, %v2698
  %v2700 = vsel %vm2668, %v2428, 0.0
  %v2701 = vadd.f32 %v2699, %v2700
  %v2702 = vsel %vm2668, %v2429, 0.0
  %v2703 = vadd.f32 %v2701, %v2702
  %v2704 = vsel %vm2668, %v2430, 0.0
  %v2705 = vadd.f32 %v2703, %v2704
  %v2706 = vsel %vm2668, %v2431, 0.0
  %v2707 = vadd.f32 %v2705, %v2706
  %v2708 = vsel %vm2668, %v2432, 0.0
  %v2709 = vadd.f32 %v2707, %v2708
  %v2710 = vsel %vm2668, %v2433, 0.0
  %v2711 = vadd.f32 %v2709, %v2710
  %v2712 = vsel %vm2668, %v2434, 0.0
  %v2713 = vadd.f32 %v2711, %v2712
  %v2714 = vsel %vm2668, %v2435, 0.0
  %v2715 = vadd.f32 %v2713, %v2714
  %v2716 = vsel %vm2668, %v2436, 0.0
  %v2717 = vadd.f32 %v2715, %v2716
  %v2718 = vsel %vm2668, %v2437, 0.0
  %v2719 = vadd.f32 %v2717, %v2718
  %v2720 = vsel %vm2668, %v2438, 0.0
  %v2721 = vadd.f32 %v2719, %v2720
  %v2722 = vsel %vm2668, %v2439, 0.0
  %v2723 = vadd.f32 %v2721, %v2722
  %v2724 = vsel %vm2668, %v2440, 0.0
  %v2725 = vadd.f32 %v2723, %v2724
  %v2726 = vsel %vm2668, %v2441, 0.0
  %v2727 = vadd.f32 %v2725, %v2726
  %v2728 = vsel %vm2668, %v2442, 0.0
  %v2729 = vadd.f32 %v2727, %v2728
  %v2730 = vsel %vm2668, %v2443, 0.0
  %v2731 = vadd.f32 %v2729, %v2730
  %v2732 = vrot.slane %v2731, 4
  %v2733 = vadd.f32 %v2731, %v2732
  %v2734 = vrot.slane %v2733, 2
  %v2735 = vadd.f32 %v2733, %v2734
  %v2736 = vrot.slane %v2735, 1
  %v2737 = vadd.f32 %v2735, %v2736
  %v2738 = vsel %vm2668, %v2444, 0.0
  %v2739 = vsel %vm2668, %v2445, 0.0
  %v2740 = vadd.f32 %v2738, %v2739
  %v2741 = vsel %vm2668, %v2446, 0.0
  %v2742 = vadd.f32 %v2740, %v2741
  %v2743 = vsel %vm2668, %v2447, 0.0
  %v2744 = vadd.f32 %v2742, %v2743
  %v2745 = vsel %vm2668, %v2448, 0.0
  %v2746 = vadd.f32 %v2744, %v2745
  %v2747 = vsel %vm2668, %v2449, 0.0
  %v2748 = vadd.f32 %v2746, %v2747
  %v2749 = vsel %vm2668, %v2450, 0.0
  %v2750 = vadd.f32 %v2748, %v2749
  %v2751 = vsel %vm2668, %v2451, 0.0
  %v2752 = vadd.f32 %v2750, %v2751
  %v2753 = vsel %vm2668, %v2452, 0.0
  %v2754 = vadd.f32 %v2752, %v2753
  %v2755 = vsel %vm2668, %v2453, 0.0
  %v2756 = vadd.f32 %v2754, %v2755
  %v2757 = vsel %vm2668, %v2454, 0.0
  %v2758 = vadd.f32 %v2756, %v2757
  %v2759 = vsel %vm2668, %v2455, 0.0
  %v2760 = vadd.f32 %v2758, %v2759
  %v2761 = vsel %vm2668, %v2456, 0.0
  %v2762 = vadd.f32 %v2760, %v2761
  %v2763 = vsel %vm2668, %v2457, 0.0
  %v2764 = vadd.f32 %v2762, %v2763
  %v2765 = vsel %vm2668, %v2458, 0.0
  %v2766 = vadd.f32 %v2764, %v2765
  %v2767 = vsel %vm2668, %v2459, 0.0
  %v2768 = vadd.f32 %v2766, %v2767
  %v2769 = vsel %vm2668, %v2460, 0.0
  %v2770 = vadd.f32 %v2768, %v2769
  %v2771 = vsel %vm2668, %v2461, 0.0
  %v2772 = vadd.f32 %v2770, %v2771
  %v2773 = vsel %vm2668, %v2462, 0.0
  %v2774 = vadd.f32 %v2772, %v2773
  %v2775 = vsel %vm2668, %v2463, 0.0
  %v2776 = vadd.f32 %v2774, %v2775
  %v2777 = vsel %vm2668, %v2464, 0.0
  %v2778 = vadd.f32 %v2776, %v2777
  %v2779 = vsel %vm2668, %v2465, 0.0
  %v2780 = vadd.f32 %v2778, %v2779
  %v2781 = vsel %vm2668, %v2466, 0.0
  %v2782 = vadd.f32 %v2780, %v2781
  %v2783 = vsel %vm2668, %v2467, 0.0
  %v2784 = vadd.f32 %v2782, %v2783
  %v2785 = vsel %vm2668, %v2468, 0.0
  %v2786 = vadd.f32 %v2784, %v2785
  %v2787 = vsel %vm2668, %v2469, 0.0
  %v2788 = vadd.f32 %v2786, %v2787
  %v2789 = vsel %vm2668, %v2470, 0.0
  %v2790 = vadd.f32 %v2788, %v2789
  %v2791 = vsel %vm2668, %v2471, 0.0
  %v2792 = vadd.f32 %v2790, %v2791
  %v2793 = vsel %vm2668, %v2472, 0.0
  %v2794 = vadd.f32 %v2792, %v2793
  %v2795 = vsel %vm2668, %v2473, 0.0
  %v2796 = vadd.f32 %v2794, %v2795
  %v2797 = vsel %vm2668, %v2474, 0.0
  %v2798 = vadd.f32 %v2796, %v2797
  %v2799 = vsel %vm2668, %v2475, 0.0
  %v2800 = vadd.f32 %v2798, %v2799
  %v2801 = vrot.slane %v2800, 4
  %v2802 = vadd.f32 %v2800, %v2801
  %v2803 = vrot.slane %v2802, 2
  %v2804 = vadd.f32 %v2802, %v2803
  %v2805 = vrot.slane %v2804, 1
  %v2806 = vadd.f32 %v2804, %v2805
  %v2807 = vsel %vm2668, %v2476, 0.0
  %v2808 = vsel %vm2668, %v2477, 0.0
  %v2809 = vadd.f32 %v2807, %v2808
  %v2810 = vsel %vm2668, %v2478, 0.0
  %v2811 = vadd.f32 %v2809, %v2810
  %v2812 = vsel %vm2668, %v2479, 0.0
  %v2813 = vadd.f32 %v2811, %v2812
  %v2814 = vsel %vm2668, %v2480, 0.0
  %v2815 = vadd.f32 %v2813, %v2814
  %v2816 = vsel %vm2668, %v2481, 0.0
  %v2817 = vadd.f32 %v2815, %v2816
  %v2818 = vsel %vm2668, %v2482, 0.0
  %v2819 = vadd.f32 %v2817, %v2818
  %v2820 = vsel %vm2668, %v2483, 0.0
  %v2821 = vadd.f32 %v2819, %v2820
  %v2822 = vsel %vm2668, %v2484, 0.0
  %v2823 = vadd.f32 %v2821, %v2822
  %v2824 = vsel %vm2668, %v2485, 0.0
  %v2825 = vadd.f32 %v2823, %v2824
  %v2826 = vsel %vm2668, %v2486, 0.0
  %v2827 = vadd.f32 %v2825, %v2826
  %v2828 = vsel %vm2668, %v2487, 0.0
  %v2829 = vadd.f32 %v2827, %v2828
  %v2830 = vsel %vm2668, %v2488, 0.0
  %v2831 = vadd.f32 %v2829, %v2830
  %v2832 = vsel %vm2668, %v2489, 0.0
  %v2833 = vadd.f32 %v2831, %v2832
  %v2834 = vsel %vm2668, %v2490, 0.0
  %v2835 = vadd.f32 %v2833, %v2834
  %v2836 = vsel %vm2668, %v2491, 0.0
  %v2837 = vadd.f32 %v2835, %v2836
  %v2838 = vsel %vm2668, %v2492, 0.0
  %v2839 = vadd.f32 %v2837, %v2838
  %v2840 = vsel %vm2668, %v2493, 0.0
  %v2841 = vadd.f32 %v2839, %v2840
  %v2842 = vsel %vm2668, %v2494, 0.0
  %v2843 = vadd.f32 %v2841, %v2842
  %v2844 = vsel %vm2668, %v2495, 0.0
  %v2845 = vadd.f32 %v2843, %v2844
  %v2846 = vsel %vm2668, %v2496, 0.0
  %v2847 = vadd.f32 %v2845, %v2846
  %v2848 = vsel %vm2668, %v2497, 0.0
  %v2849 = vadd.f32 %v2847, %v2848
  %v2850 = vsel %vm2668, %v2498, 0.0
  %v2851 = vadd.f32 %v2849, %v2850
  %v2852 = vsel %vm2668, %v2499, 0.0
  %v2853 = vadd.f32 %v2851, %v2852
  %v2854 = vsel %vm2668, %v2500, 0.0
  %v2855 = vadd.f32 %v2853, %v2854
  %v2856 = vsel %vm2668, %v2501, 0.0
  %v2857 = vadd.f32 %v2855, %v2856
  %v2858 = vsel %vm2668, %v2502, 0.0
  %v2859 = vadd.f32 %v2857, %v2858
  %v2860 = vsel %vm2668, %v2503, 0.0
  %v2861 = vadd.f32 %v2859, %v2860
  %v2862 = vsel %vm2668, %v2504, 0.0
  %v2863 = vadd.f32 %v2861, %v2862
  %v2864 = vsel %vm2668, %v2505, 0.0
  %v2865 = vadd.f32 %v2863, %v2864
  %v2866 = vsel %vm2668, %v2506, 0.0
  %v2867 = vadd.f32 %v2865, %v2866
  %v2868 = vsel %vm2668, %v2507, 0.0
  %v2869 = vadd.f32 %v2867, %v2868
  %v2870 = vrot.slane %v2869, 4
  %v2871 = vadd.f32 %v2869, %v2870
  %v2872 = vrot.slane %v2871, 2
  %v2873 = vadd.f32 %v2871, %v2872
  %v2874 = vrot.slane %v2873, 1
  %v2875 = vadd.f32 %v2873, %v2874
  %v2876 = vsel %vm2668, %v2508, 0.0
  %v2877 = vsel %vm2668, %v2509, 0.0
  %v2878 = vadd.f32 %v2876, %v2877
  %v2879 = vsel %vm2668, %v2510, 0.0
  %v2880 = vadd.f32 %v2878, %v2879
  %v2881 = vsel %vm2668, %v2511, 0.0
  %v2882 = vadd.f32 %v2880, %v2881
  %v2883 = vsel %vm2668, %v2512, 0.0
  %v2884 = vadd.f32 %v2882, %v2883
  %v2885 = vsel %vm2668, %v2513, 0.0
  %v2886 = vadd.f32 %v2884, %v2885
  %v2887 = vsel %vm2668, %v2514, 0.0
  %v2888 = vadd.f32 %v2886, %v2887
  %v2889 = vsel %vm2668, %v2515, 0.0
  %v2890 = vadd.f32 %v2888, %v2889
  %v2891 = vsel %vm2668, %v2516, 0.0
  %v2892 = vadd.f32 %v2890, %v2891
  %v2893 = vsel %vm2668, %v2517, 0.0
  %v2894 = vadd.f32 %v2892, %v2893
  %v2895 = vsel %vm2668, %v2518, 0.0
  %v2896 = vadd.f32 %v2894, %v2895
  %v2897 = vsel %vm2668, %v2519, 0.0
  %v2898 = vadd.f32 %v2896, %v2897
  %v2899 = vsel %vm2668, %v2520, 0.0
  %v2900 = vadd.f32 %v2898, %v2899
  %v2901 = vsel %vm2668, %v2521, 0.0
  %v2902 = vadd.f32 %v2900, %v2901
  %v2903 = vsel %vm2668, %v2522, 0.0
  %v2904 = vadd.f32 %v2902, %v2903
  %v2905 = vsel %vm2668, %v2523, 0.0
  %v2906 = vadd.f32 %v2904, %v2905
  %v2907 = vsel %vm2668, %v2524, 0.0
  %v2908 = vadd.f32 %v2906, %v2907
  %v2909 = vsel %vm2668, %v2525, 0.0
  %v2910 = vadd.f32 %v2908, %v2909
  %v2911 = vsel %vm2668, %v2526, 0.0
  %v2912 = vadd.f32 %v2910, %v2911
  %v2913 = vsel %vm2668, %v2527, 0.0
  %v2914 = vadd.f32 %v2912, %v2913
  %v2915 = vsel %vm2668, %v2528, 0.0
  %v2916 = vadd.f32 %v2914, %v2915
  %v2917 = vsel %vm2668, %v2529, 0.0
  %v2918 = vadd.f32 %v2916, %v2917
  %v2919 = vsel %vm2668, %v2530, 0.0
  %v2920 = vadd.f32 %v2918, %v2919
  %v2921 = vsel %vm2668, %v2531, 0.0
  %v2922 = vadd.f32 %v2920, %v2921
  %v2923 = vsel %vm2668, %v2532, 0.0
  %v2924 = vadd.f32 %v2922, %v2923
  %v2925 = vsel %vm2668, %v2533, 0.0
  %v2926 = vadd.f32 %v2924, %v2925
  %v2927 = vsel %vm2668, %v2534, 0.0
  %v2928 = vadd.f32 %v2926, %v2927
  %v2929 = vsel %vm2668, %v2535, 0.0
  %v2930 = vadd.f32 %v2928, %v2929
  %v2931 = vsel %vm2668, %v2536, 0.0
  %v2932 = vadd.f32 %v2930, %v2931
  %v2933 = vsel %vm2668, %v2537, 0.0
  %v2934 = vadd.f32 %v2932, %v2933
  %v2935 = vsel %vm2668, %v2538, 0.0
  %v2936 = vadd.f32 %v2934, %v2935
  %v2937 = vsel %vm2668, %v2539, 0.0
  %v2938 = vadd.f32 %v2936, %v2937
  %v2939 = vrot.slane %v2938, 4
  %v2940 = vadd.f32 %v2938, %v2939
  %v2941 = vrot.slane %v2940, 2
  %v2942 = vadd.f32 %v2940, %v2941
  %v2943 = vrot.slane %v2942, 1
  %v2944 = vadd.f32 %v2942, %v2943
  %v2945 = vsel %vm2668, %v2540, 0.0
  %v2946 = vsel %vm2668, %v2541, 0.0
  %v2947 = vadd.f32 %v2945, %v2946
  %v2948 = vsel %vm2668, %v2542, 0.0
  %v2949 = vadd.f32 %v2947, %v2948
  %v2950 = vsel %vm2668, %v2543, 0.0
  %v2951 = vadd.f32 %v2949, %v2950
  %v2952 = vsel %vm2668, %v2544, 0.0
  %v2953 = vadd.f32 %v2951, %v2952
  %v2954 = vsel %vm2668, %v2545, 0.0
  %v2955 = vadd.f32 %v2953, %v2954
  %v2956 = vsel %vm2668, %v2546, 0.0
  %v2957 = vadd.f32 %v2955, %v2956
  %v2958 = vsel %vm2668, %v2547, 0.0
  %v2959 = vadd.f32 %v2957, %v2958
  %v2960 = vsel %vm2668, %v2548, 0.0
  %v2961 = vadd.f32 %v2959, %v2960
  %v2962 = vsel %vm2668, %v2549, 0.0
  %v2963 = vadd.f32 %v2961, %v2962
  %v2964 = vsel %vm2668, %v2550, 0.0
  %v2965 = vadd.f32 %v2963, %v2964
  %v2966 = vsel %vm2668, %v2551, 0.0
  %v2967 = vadd.f32 %v2965, %v2966
  %v2968 = vsel %vm2668, %v2552, 0.0
  %v2969 = vadd.f32 %v2967, %v2968
  %v2970 = vsel %vm2668, %v2553, 0.0
  %v2971 = vadd.f32 %v2969, %v2970
  %v2972 = vsel %vm2668, %v2554, 0.0
  %v2973 = vadd.f32 %v2971, %v2972
  %v2974 = vsel %vm2668, %v2555, 0.0
  %v2975 = vadd.f32 %v2973, %v2974
  %v2976 = vsel %vm2668, %v2556, 0.0
  %v2977 = vadd.f32 %v2975, %v2976
  %v2978 = vsel %vm2668, %v2557, 0.0
  %v2979 = vadd.f32 %v2977, %v2978
  %v2980 = vsel %vm2668, %v2558, 0.0
  %v2981 = vadd.f32 %v2979, %v2980
  %v2982 = vsel %vm2668, %v2559, 0.0
  %v2983 = vadd.f32 %v2981, %v2982
  %v2984 = vsel %vm2668, %v2560, 0.0
  %v2985 = vadd.f32 %v2983, %v2984
  %v2986 = vsel %vm2668, %v2561, 0.0
  %v2987 = vadd.f32 %v2985, %v2986
  %v2988 = vsel %vm2668, %v2562, 0.0
  %v2989 = vadd.f32 %v2987, %v2988
  %v2990 = vsel %vm2668, %v2563, 0.0
  %v2991 = vadd.f32 %v2989, %v2990
  %v2992 = vsel %vm2668, %v2564, 0.0
  %v2993 = vadd.f32 %v2991, %v2992
  %v2994 = vsel %vm2668, %v2565, 0.0
  %v2995 = vadd.f32 %v2993, %v2994
  %v2996 = vsel %vm2668, %v2566, 0.0
  %v2997 = vadd.f32 %v2995, %v2996
  %v2998 = vsel %vm2668, %v2567, 0.0
  %v2999 = vadd.f32 %v2997, %v2998
  %v3000 = vsel %vm2668, %v2568, 0.0
  %v3001 = vadd.f32 %v2999, %v3000
  %v3002 = vsel %vm2668, %v2569, 0.0
  %v3003 = vadd.f32 %v3001, %v3002
  %v3004 = vsel %vm2668, %v2570, 0.0
  %v3005 = vadd.f32 %v3003, %v3004
  %v3006 = vsel %vm2668, %v2571, 0.0
  %v3007 = vadd.f32 %v3005, %v3006
  %v3008 = vrot.slane %v3007, 4
  %v3009 = vadd.f32 %v3007, %v3008
  %v3010 = vrot.slane %v3009, 2
  %v3011 = vadd.f32 %v3009, %v3010
  %v3012 = vrot.slane %v3011, 1
  %v3013 = vadd.f32 %v3011, %v3012
  %v3014 = vsel %vm2668, %v2572, 0.0
  %v3015 = vsel %vm2668, %v2573, 0.0
  %v3016 = vadd.f32 %v3014, %v3015
  %v3017 = vsel %vm2668, %v2574, 0.0
  %v3018 = vadd.f32 %v3016, %v3017
  %v3019 = vsel %vm2668, %v2575, 0.0
  %v3020 = vadd.f32 %v3018, %v3019
  %v3021 = vsel %vm2668, %v2576, 0.0
  %v3022 = vadd.f32 %v3020, %v3021
  %v3023 = vsel %vm2668, %v2577, 0.0
  %v3024 = vadd.f32 %v3022, %v3023
  %v3025 = vsel %vm2668, %v2578, 0.0
  %v3026 = vadd.f32 %v3024, %v3025
  %v3027 = vsel %vm2668, %v2579, 0.0
  %v3028 = vadd.f32 %v3026, %v3027
  %v3029 = vsel %vm2668, %v2580, 0.0
  %v3030 = vadd.f32 %v3028, %v3029
  %v3031 = vsel %vm2668, %v2581, 0.0
  %v3032 = vadd.f32 %v3030, %v3031
  %v3033 = vsel %vm2668, %v2582, 0.0
  %v3034 = vadd.f32 %v3032, %v3033
  %v3035 = vsel %vm2668, %v2583, 0.0
  %v3036 = vadd.f32 %v3034, %v3035
  %v3037 = vsel %vm2668, %v2584, 0.0
  %v3038 = vadd.f32 %v3036, %v3037
  %v3039 = vsel %vm2668, %v2585, 0.0
  %v3040 = vadd.f32 %v3038, %v3039
  %v3041 = vsel %vm2668, %v2586, 0.0
  %v3042 = vadd.f32 %v3040, %v3041
  %v3043 = vsel %vm2668, %v2587, 0.0
  %v3044 = vadd.f32 %v3042, %v3043
  %v3045 = vsel %vm2668, %v2588, 0.0
  %v3046 = vadd.f32 %v3044, %v3045
  %v3047 = vsel %vm2668, %v2589, 0.0
  %v3048 = vadd.f32 %v3046, %v3047
  %v3049 = vsel %vm2668, %v2590, 0.0
  %v3050 = vadd.f32 %v3048, %v3049
  %v3051 = vsel %vm2668, %v2591, 0.0
  %v3052 = vadd.f32 %v3050, %v3051
  %v3053 = vsel %vm2668, %v2592, 0.0
  %v3054 = vadd.f32 %v3052, %v3053
  %v3055 = vsel %vm2668, %v2593, 0.0
  %v3056 = vadd.f32 %v3054, %v3055
  %v3057 = vsel %vm2668, %v2594, 0.0
  %v3058 = vadd.f32 %v3056, %v3057
  %v3059 = vsel %vm2668, %v2595, 0.0
  %v3060 = vadd.f32 %v3058, %v3059
  %v3061 = vsel %vm2668, %v2596, 0.0
  %v3062 = vadd.f32 %v3060, %v3061
  %v3063 = vsel %vm2668, %v2597, 0.0
  %v3064 = vadd.f32 %v3062, %v3063
  %v3065 = vsel %vm2668, %v2598, 0.0
  %v3066 = vadd.f32 %v3064, %v3065
  %v3067 = vsel %vm2668, %v2599, 0.0
  %v3068 = vadd.f32 %v3066, %v3067
  %v3069 = vsel %vm2668, %v2600, 0.0
  %v3070 = vadd.f32 %v3068, %v3069
  %v3071 = vsel %vm2668, %v2601, 0.0
  %v3072 = vadd.f32 %v3070, %v3071
  %v3073 = vsel %vm2668, %v2602, 0.0
  %v3074 = vadd.f32 %v3072, %v3073
  %v3075 = vsel %vm2668, %v2603, 0.0
  %v3076 = vadd.f32 %v3074, %v3075
  %v3077 = vrot.slane %v3076, 4
  %v3078 = vadd.f32 %v3076, %v3077
  %v3079 = vrot.slane %v3078, 2
  %v3080 = vadd.f32 %v3078, %v3079
  %v3081 = vrot.slane %v3080, 1
  %v3082 = vadd.f32 %v3080, %v3081
  %v3083 = vsel %vm2668, %v2604, 0.0
  %v3084 = vsel %vm2668, %v2605, 0.0
  %v3085 = vadd.f32 %v3083, %v3084
  %v3086 = vsel %vm2668, %v2606, 0.0
  %v3087 = vadd.f32 %v3085, %v3086
  %v3088 = vsel %vm2668, %v2607, 0.0
  %v3089 = vadd.f32 %v3087, %v3088
  %v3090 = vsel %vm2668, %v2608, 0.0
  %v3091 = vadd.f32 %v3089, %v3090
  %v3092 = vsel %vm2668, %v2609, 0.0
  %v3093 = vadd.f32 %v3091, %v3092
  %v3094 = vsel %vm2668, %v2610, 0.0
  %v3095 = vadd.f32 %v3093, %v3094
  %v3096 = vsel %vm2668, %v2611, 0.0
  %v3097 = vadd.f32 %v3095, %v3096
  %v3098 = vsel %vm2668, %v2612, 0.0
  %v3099 = vadd.f32 %v3097, %v3098
  %v3100 = vsel %vm2668, %v2613, 0.0
  %v3101 = vadd.f32 %v3099, %v3100
  %v3102 = vsel %vm2668, %v2614, 0.0
  %v3103 = vadd.f32 %v3101, %v3102
  %v3104 = vsel %vm2668, %v2615, 0.0
  %v3105 = vadd.f32 %v3103, %v3104
  %v3106 = vsel %vm2668, %v2616, 0.0
  %v3107 = vadd.f32 %v3105, %v3106
  %v3108 = vsel %vm2668, %v2617, 0.0
  %v3109 = vadd.f32 %v3107, %v3108
  %v3110 = vsel %vm2668, %v2618, 0.0
  %v3111 = vadd.f32 %v3109, %v3110
  %v3112 = vsel %vm2668, %v2619, 0.0
  %v3113 = vadd.f32 %v3111, %v3112
  %v3114 = vsel %vm2668, %v2620, 0.0
  %v3115 = vadd.f32 %v3113, %v3114
  %v3116 = vsel %vm2668, %v2621, 0.0
  %v3117 = vadd.f32 %v3115, %v3116
  %v3118 = vsel %vm2668, %v2622, 0.0
  %v3119 = vadd.f32 %v3117, %v3118
  %v3120 = vsel %vm2668, %v2623, 0.0
  %v3121 = vadd.f32 %v3119, %v3120
  %v3122 = vsel %vm2668, %v2624, 0.0
  %v3123 = vadd.f32 %v3121, %v3122
  %v3124 = vsel %vm2668, %v2625, 0.0
  %v3125 = vadd.f32 %v3123, %v3124
  %v3126 = vsel %vm2668, %v2626, 0.0
  %v3127 = vadd.f32 %v3125, %v3126
  %v3128 = vsel %vm2668, %v2627, 0.0
  %v3129 = vadd.f32 %v3127, %v3128
  %v3130 = vsel %vm2668, %v2628, 0.0
  %v3131 = vadd.f32 %v3129, %v3130
  %v3132 = vsel %vm2668, %v2629, 0.0
  %v3133 = vadd.f32 %v3131, %v3132
  %v3134 = vsel %vm2668, %v2630, 0.0
  %v3135 = vadd.f32 %v3133, %v3134
  %v3136 = vsel %vm2668, %v2631, 0.0
  %v3137 = vadd.f32 %v3135, %v3136
  %v3138 = vsel %vm2668, %v2632, 0.0
  %v3139 = vadd.f32 %v3137, %v3138
  %v3140 = vsel %vm2668, %v2633, 0.0
  %v3141 = vadd.f32 %v3139, %v3140
  %v3142 = vsel %vm2668, %v2634, 0.0
  %v3143 = vadd.f32 %v3141, %v3142
  %v3144 = vsel %vm2668, %v2635, 0.0
  %v3145 = vadd.f32 %v3143, %v3144
  %v3146 = vrot.slane %v3145, 4
  %v3147 = vadd.f32 %v3145, %v3146
  %v3148 = vrot.slane %v3147, 2
  %v3149 = vadd.f32 %v3147, %v3148
  %v3150 = vrot.slane %v3149, 1
  %v3151 = vadd.f32 %v3149, %v3150
  %v3152 = vsel %vm2668, %v2636, 0.0
  %v3153 = vsel %vm2668, %v2637, 0.0
  %v3154 = vadd.f32 %v3152, %v3153
  %v3155 = vsel %vm2668, %v2638, 0.0
  %v3156 = vadd.f32 %v3154, %v3155
  %v3157 = vsel %vm2668, %v2639, 0.0
  %v3158 = vadd.f32 %v3156, %v3157
  %v3159 = vsel %vm2668, %v2640, 0.0
  %v3160 = vadd.f32 %v3158, %v3159
  %v3161 = vsel %vm2668, %v2641, 0.0
  %v3162 = vadd.f32 %v3160, %v3161
  %v3163 = vsel %vm2668, %v2642, 0.0
  %v3164 = vadd.f32 %v3162, %v3163
  %v3165 = vsel %vm2668, %v2643, 0.0
  %v3166 = vadd.f32 %v3164, %v3165
  %v3167 = vsel %vm2668, %v2644, 0.0
  %v3168 = vadd.f32 %v3166, %v3167
  %v3169 = vsel %vm2668, %v2645, 0.0
  %v3170 = vadd.f32 %v3168, %v3169
  %v3171 = vsel %vm2668, %v2646, 0.0
  %v3172 = vadd.f32 %v3170, %v3171
  %v3173 = vsel %vm2668, %v2647, 0.0
  %v3174 = vadd.f32 %v3172, %v3173
  %v3175 = vsel %vm2668, %v2648, 0.0
  %v3176 = vadd.f32 %v3174, %v3175
  %v3177 = vsel %vm2668, %v2649, 0.0
  %v3178 = vadd.f32 %v3176, %v3177
  %v3179 = vsel %vm2668, %v2650, 0.0
  %v3180 = vadd.f32 %v3178, %v3179
  %v3181 = vsel %vm2668, %v2651, 0.0
  %v3182 = vadd.f32 %v3180, %v3181
  %v3183 = vsel %vm2668, %v2652, 0.0
  %v3184 = vadd.f32 %v3182, %v3183
  %v3185 = vsel %vm2668, %v2653, 0.0
  %v3186 = vadd.f32 %v3184, %v3185
  %v3187 = vsel %vm2668, %v2654, 0.0
  %v3188 = vadd.f32 %v3186, %v3187
  %v3189 = vsel %vm2668, %v2655, 0.0
  %v3190 = vadd.f32 %v3188, %v3189
  %v3191 = vsel %vm2668, %v2656, 0.0
  %v3192 = vadd.f32 %v3190, %v3191
  %v3193 = vsel %vm2668, %v2657, 0.0
  %v3194 = vadd.f32 %v3192, %v3193
  %v3195 = vsel %vm2668, %v2658, 0.0
  %v3196 = vadd.f32 %v3194, %v3195
  %v3197 = vsel %vm2668, %v2659, 0.0
  %v3198 = vadd.f32 %v3196, %v3197
  %v3199 = vsel %vm2668, %v2660, 0.0
  %v3200 = vadd.f32 %v3198, %v3199
  %v3201 = vsel %vm2668, %v2661, 0.0
  %v3202 = vadd.f32 %v3200, %v3201
  %v3203 = vsel %vm2668, %v2662, 0.0
  %v3204 = vadd.f32 %v3202, %v3203
  %v3205 = vsel %vm2668, %v2663, 0.0
  %v3206 = vadd.f32 %v3204, %v3205
  %v3207 = vsel %vm2668, %v2664, 0.0
  %v3208 = vadd.f32 %v3206, %v3207
  %v3209 = vsel %vm2668, %v2665, 0.0
  %v3210 = vadd.f32 %v3208, %v3209
  %v3211 = vsel %vm2668, %v2666, 0.0
  %v3212 = vadd.f32 %v3210, %v3211
  %v3213 = vsel %vm2668, %v2667, 0.0
  %v3214 = vadd.f32 %v3212, %v3213
  %v3215 = vrot.slane %v3214, 4
  %v3216 = vadd.f32 %v3214, %v3215
  %v3217 = vrot.slane %v3216, 2
  %v3218 = vadd.f32 %v3216, %v3217
  %v3219 = vrot.slane %v3218, 1
  %v3220 = vadd.f32 %v3218, %v3219
  %v3221 = vmul.f32 %v2737, 0.00390625
  %v3222 = vmul.f32 %v2806, 0.00390625
  %v3223 = vmul.f32 %v2875, 0.00390625
  %v3224 = vmul.f32 %v2944, 0.00390625
  %v3225 = vmul.f32 %v3013, 0.00390625
  %v3226 = vmul.f32 %v3082, 0.00390625
  %v3227 = vmul.f32 %v3151, 0.00390625
  %v3228 = vmul.f32 %v3220, 0.00390625
  %v3229 = vld [vmem:[%s3] sm:$0xff]
  %v3230 = vld [vmem:[%s3 + $0x8] sm:$0xff]
  %v3231 = vld [vmem:[%s3 + $0x10] sm:$0xff]
  %v3232 = vld [vmem:[%s3 + $0x18] sm:$0xff]
  %v3233 = vld [vmem:[%s4] sm:$0x1]
  %v3235 = vlaneseq
  %v3236 = vshrl.u32 %v3235, 7
  %v3237 = vsub.s32 0, %v3236
  %v3238 = vrot.slane %v3233, %v3237
  %vm3248 = vcmask 1041409
  %v3249 = vsel %vm3248, %v3222, %v3221
  %vm3250 = vcmask 1042434
  %v3251 = vsel %vm3250, %v3223, %v3249
  %vm3252 = vcmask 1043459
  %v3253 = vsel %vm3252, %v3224, %v3251
  %vm3254 = vcmask 1044484
  %v3255 = vsel %vm3254, %v3225, %v3253
  %vm3256 = vcmask 1045509
  %v3257 = vsel %vm3256, %v3226, %v3255
  %vm3258 = vcmask 1046534
  %v3259 = vsel %vm3258, %v3227, %v3257
  %vm3260 = vcmask 1047559
  %v3261 = vsel %vm3260, %v3228, %v3259
  %v3262 = vsel %vm2668, %v3261, 0
  %3264 = vmatprep.subr.mxu0 0.0
  %3265 = vmatpush1.msra.mxu0 0.0
  %3266 = vmatprep.subr.mxu0 0.0
  %3267 = vmatpush1.msra.mxu0 0.0
  %3268 = vmatprep.subr.mxu0 0.0
  %3269 = vmatpush1.msra.mxu0 0.0
  %3270 = vmatprep.subr.mxu0 0.0
  %3271 = vmatpush1.msra.mxu0 0.0
  %3272 = vmatprep.subr.mxu0 0.0
  %3273 = vmatpush1.msra.mxu0 0.0
  %3274 = vmatprep.subr.mxu0 0.0
  %3275 = vmatpush1.msra.mxu0 0.0
  %3276 = vmatprep.subr.mxu0 0.0
  %3277 = vmatpush1.msra.mxu0 0.0
  %3278 = vmatprep.subr.mxu0 0.0
  %3279 = vmatpush1.msra.mxu0 0.0
  %3280 = vmatprep.subr.mxu0 0.0
  %3281 = vmatpush1.msra.mxu0 0.0
  %3282 = vmatprep.subr.mxu0 0.0
  %3283 = vmatpush1.msra.mxu0 0.0
  %3284 = vmatprep.subr.mxu0 0.0
  %3285 = vmatpush1.msra.mxu0 0.0
  %3286 = vmatprep.subr.mxu0 0.0
  %3287 = vmatpush1.msra.mxu0 0.0
  %3288 = vmatprep.subr.mxu0 0.0
  %3289 = vmatpush1.msra.mxu0 %v3232
  %3290 = vmatprep.subr.mxu0 0.0
  %3291 = vmatpush1.msra.mxu0 %v3231
  %3292 = vmatprep.subr.mxu0 0.0
  %3293 = vmatpush1.msra.mxu0 %v3230
  %3294 = vmatprep.subr.mxu0 0.0
  %3295 = vmatpush1.msra.mxu0 %v3229
  %3296 = vmatprep.subr.mxu0 0.0
  %3297 = vmatpush2.msra.mxu0 0.0
  %3298 = vmatprep.subr.mxu0 0.0
  %3299 = vmatpush2.msra.mxu0 0.0
  %3300 = vmatprep.subr.mxu0 0.0
  %3301 = vmatpush2.msra.mxu0 0.0
  %3302 = vmatprep.subr.mxu0 0.0
  %3303 = vmatpush2.msra.mxu0 0.0
  %3304 = vmatprep.subr.mxu0 0.0
  %3305 = vmatpush2.msra.mxu0 0.0
  %3306 = vmatprep.subr.mxu0 0.0
  %3307 = vmatpush2.msra.mxu0 0.0
  %3308 = vmatprep.subr.mxu0 0.0
  %3309 = vmatpush2.msra.mxu0 0.0
  %3310 = vmatprep.subr.mxu0 0.0
  %3311 = vmatpush2.msra.mxu0 0.0
  %3312 = vmatprep.subr.mxu0 0.0
  %3313 = vmatpush2.msra.mxu0 0.0
  %3314 = vmatprep.subr.mxu0 0.0
  %3315 = vmatpush2.msra.mxu0 0.0
  %3316 = vmatprep.subr.mxu0 0.0
  %3317 = vmatpush2.msra.mxu0 0.0
  %3318 = vmatprep.subr.mxu0 0.0
  %3319 = vmatpush2.msra.mxu0 0.0
  %3320 = vmatprep.subr.mxu0 0.0
  %3321 = vmatpush2.msra.mxu0 0.0
  %3322 = vmatprep.subr.mxu0 0.0
  %3323 = vmatpush2.msra.mxu0 0.0
  %3324 = vmatprep.subr.mxu0 0.0
  %3325 = vmatpush2.msra.mxu0 0.0
  %3326 = vmatprep.subr.mxu0 0.0
  %3327 = vmatpush2.msra.mxu0 0.0
  %3328 = vmatprep.mubr.f32.mxu0 0.0
  %3329 = vmatmul.mubr.f32.gmra.mxu0 %v3262
  %v3330 = vpop.f32.mrf.mxu0
  %v3331 = vadd.f32 %v3238, %v3330
  %v3332 = vpop.f32.mrf.mxu0
  %3333 = vdwg.mxu0
  %v3334 = vmax.f32 %v3331, 0.0
  %v3335 = vld [vmem:[%s5] sm:$0xff]
  %v3336 = vld [vmem:[%s5 + $0x8] sm:$0xff]
  %v3337 = vld [vmem:[%s5 + $0x10] sm:$0xff]
  %v3338 = vld [vmem:[%s5 + $0x18] sm:$0xff]
  %v3339 = vld [vmem:[%s5 + $0x20] sm:$0xff]
  %v3340 = vld [vmem:[%s5 + $0x28] sm:$0xff]
  %v3341 = vld [vmem:[%s5 + $0x30] sm:$0xff]
  %v3342 = vld [vmem:[%s5 + $0x38] sm:$0xff]
  %v3343 = vld [vmem:[%s6] sm:$0x1]
  %v3345 = vlaneseq
  %v3346 = vshrl.u32 %v3345, 7
  %v3347 = vsub.s32 0, %v3346
  %v3348 = vrot.slane %v3343, %v3347
  %vm3350 = vcmask 523264
  %v3352 = vsel %vm3350, %v3334, 0
  %3354 = vmatprep.subr.mxu0 0.0
  %3355 = vmatpush1.msra.mxu0 0.0
  %3356 = vmatprep.subr.mxu0 0.0
  %3357 = vmatpush1.msra.mxu0 0.0
  %3358 = vmatprep.subr.mxu0 0.0
  %3359 = vmatpush1.msra.mxu0 0.0
  %3360 = vmatprep.subr.mxu0 0.0
  %3361 = vmatpush1.msra.mxu0 0.0
  %3362 = vmatprep.subr.mxu0 0.0
  %3363 = vmatpush1.msra.mxu0 0.0
  %3364 = vmatprep.subr.mxu0 0.0
  %3365 = vmatpush1.msra.mxu0 0.0
  %3366 = vmatprep.subr.mxu0 0.0
  %3367 = vmatpush1.msra.mxu0 0.0
  %3368 = vmatprep.subr.mxu0 0.0
  %3369 = vmatpush1.msra.mxu0 0.0
  %3370 = vmatprep.subr.mxu0 0.0
  %3371 = vmatpush1.msra.mxu0 %v3342
  %3372 = vmatprep.subr.mxu0 0.0
  %3373 = vmatpush1.msra.mxu0 %v3341
  %3374 = vmatprep.subr.mxu0 0.0
  %3375 = vmatpush1.msra.mxu0 %v3340
  %3376 = vmatprep.subr.mxu0 0.0
  %3377 = vmatpush1.msra.mxu0 %v3339
  %3378 = vmatprep.subr.mxu0 0.0
  %3379 = vmatpush1.msra.mxu0 %v3338
  %3380 = vmatprep.subr.mxu0 0.0
  %3381 = vmatpush1.msra.mxu0 %v3337
  %3382 = vmatprep.subr.mxu0 0.0
  %3383 = vmatpush1.msra.mxu0 %v3336
  %3384 = vmatprep.subr.mxu0 0.0
  %3385 = vmatpush1.msra.mxu0 %v3335
  %3386 = vmatprep.subr.mxu0 0.0
  %3387 = vmatpush2.msra.mxu0 0.0
  %3388 = vmatprep.subr.mxu0 0.0
  %3389 = vmatpush2.msra.mxu0 0.0
  %3390 = vmatprep.subr.mxu0 0.0
  %3391 = vmatpush2.msra.mxu0 0.0
  %3392 = vmatprep.subr.mxu0 0.0
  %3393 = vmatpush2.msra.mxu0 0.0
  %3394 = vmatprep.subr.mxu0 0.0
  %3395 = vmatpush2.msra.mxu0 0.0
  %3396 = vmatprep.subr.mxu0 0.0
  %3397 = vmatpush2.msra.mxu0 0.0
  %3398 = vmatprep.subr.mxu0 0.0
  %3399 = vmatpush2.msra.mxu0 0.0
  %3400 = vmatprep.subr.mxu0 0.0
  %3401 = vmatpush2.msra.mxu0 0.0
  %3402 = vmatprep.subr.mxu0 0.0
  %3403 = vmatpush2.msra.mxu0 0.0
  %3404 = vmatprep.subr.mxu0 0.0
  %3405 = vmatpush2.msra.mxu0 0.0
  %3406 = vmatprep.subr.mxu0 0.0
  %3407 = vmatpush2.msra.mxu0 0.0
  %3408 = vmatprep.subr.mxu0 0.0
  %3409 = vmatpush2.msra.mxu0 0.0
  %3410 = vmatprep.subr.mxu0 0.0
  %3411 = vmatpush2.msra.mxu0 0.0
  %3412 = vmatprep.subr.mxu0 0.0
  %3413 = vmatpush2.msra.mxu0 0.0
  %3414 = vmatprep.subr.mxu0 0.0
  %3415 = vmatpush2.msra.mxu0 0.0
  %3416 = vmatprep.subr.mxu0 0.0
  %3417 = vmatpush2.msra.mxu0 0.0
  %3418 = vmatprep.mubr.f32.mxu0 0.0
  %3419 = vmatmul.mubr.f32.gmra.mxu0 %v3352
  %v3420 = vpop.f32.mrf.mxu0
  %v3421 = vadd.f32 %v3348, %v3420
  %v3422 = vpop.f32.mrf.mxu0
  %3423 = vdwg.mxu0
  %3424 = vst [vmem:[%s7] sm:$0xff] %v3421
  // Predicated region
  $region30: #{dann_apply.1} parent=0 // pred_check
    _
  $region31: #{dann_apply.1} parent=0 // pred_check_branch
    %3426 = sbr.rel (0) target = $region33
  $region32: #{dann_apply.1} parent=0 // pred_region
    _
  $region33: #{dann_apply.1} parent=0 // pred_fallthru
    _
  // Predicated region
  $region34: #{dann_apply.1} parent=0 // pred_check
    _
  $region35: #{dann_apply.1} parent=0 // pred_check_branch
    %3428 = sbr.rel (0) target = $region37
  $region36: #{dann_apply.1} parent=0 // pred_region
    _
  $region37: #{dann_apply.1} parent=0 // pred_fallthru
    _

</llo_original>
